<compile_context>
chip_gen: v7x
topology: tpu7x:2x2x1
jax: 0.10.0
libtpu: 0.0.40
codegen_flags: <defaults>
</compile_context>

<pallas_src>
import jax
import jax.numpy as jnp
from jax.experimental import pallas as pl
from jax.experimental.pallas import tpu as pltpu


def _self_attention_kernel(x_ref, qape_ref, kape_ref, pos_ref,
                           wq_ref, wk_ref, wv_ref, wp_ref, bp_ref,
                           o_ref, q_scr, k_scr, v_scr, ctx_scr):
    """One batch block per grid step; all heads handled inside the step."""
    bt, n, c = x_ref.shape
    num_heads = pos_ref.shape[1]
    d = c // num_heads
    bf16 = jnp.bfloat16

    x = x_ref[...]                                             # (bt, N, C) f32
    # Absolute positional encodings added once per batch block (may broadcast
    # over the batch dim when the APE block has batch extent 1).
    xq = (x + qape_ref[...]).reshape(bt * n, c).astype(bf16)
    xk = (x + kape_ref[...]).reshape(bt * n, c).astype(bf16)
    xv = x.reshape(bt * n, c).astype(bf16)

    # Heads fused: full-width projections, bf16 operands / f32 accumulation.
    # The attention scale is already folded into Wq in the wrapper.
    q_scr[...] = jnp.dot(xq, wq_ref[...],
                         preferred_element_type=jnp.float32).astype(bf16)
    k_scr[...] = jnp.dot(xk, wk_ref[...],
                         preferred_element_type=jnp.float32).astype(bf16)
    v_scr[...] = jnp.dot(xv, wv_ref[...],
                         preferred_element_type=jnp.float32).astype(bf16)

    # Per-head attention (these matmuls are inherently narrow: contraction D).
    for h in range(num_heads):
        sl = slice(h * d, (h + 1) * d)
        qh = q_scr[:, sl].reshape(bt, n, d)                    # (bt, N, D) bf16
        kh = k_scr[:, sl].reshape(bt, n, d)
        vh = v_scr[:, sl].reshape(bt, n, d)

        s = jnp.einsum('bqd,bkd->bqk', qh, kh,
                       preferred_element_type=jnp.float32)     # (bt, N, N) f32
        s = s + pos_ref[:, h]                                  # (1|bt, N, N)

        # Numerically-stable softmax, exact f32 divide (attn_drop is identity).
        s = s - jnp.max(s, axis=-1, keepdims=True)
        p = jnp.exp(s)
        p = p / jnp.sum(p, axis=-1, keepdims=True)

        ctx = jnp.einsum('bqk,bkd->bqd', p.astype(bf16), vh,
                         preferred_element_type=jnp.float32)   # (bt, N, D)
        ctx_scr[:, sl] = ctx.reshape(bt * n, d).astype(bf16)

    # Output projection, full width again (proj_drop is identity).
    y = jnp.dot(ctx_scr[...], wp_ref[...],
                preferred_element_type=jnp.float32)            # (bt*N, C) f32
    o_ref[...] = (y.reshape(bt, n, c) + bp_ref[...]).astype(o_ref.dtype)


def _vmem_bytes_estimate(bt, N, C, H, ape_b, pos_b):
    """Rough per-step VMEM residency (blocks + scratch + value temporaries)."""
    f32b, bf16b = 4, 2
    ape_blk = bt if ape_b > 1 else 1
    pos_blk = bt if pos_b > 1 else 1
    est = 0
    est += 2 * bt * N * C * f32b             # x block (double-buffered)
    est += 2 * bt * N * C * f32b             # out block (double-buffered)
    est += 2 * 2 * ape_blk * N * C * f32b    # q_ape + k_ape blocks
    est += 2 * pos_blk * H * N * N * f32b    # attn_pos block
    est += 4 * C * C * bf16b + C * f32b      # resident weights + bias
    est += 4 * bt * N * C * bf16b            # q/k/v/ctx VMEM scratch
    est += 3 * bt * N * N * f32b             # per-head score/prob temporaries
    est += 8 * bt * N * C * f32b             # misc value temporaries
    return est


def _pick_batch_block(B, N, C, H, ape_b, pos_b):
    # Keep >= 2 grid steps so v7x's two TensorCores both get a 'parallel' slice,
    # while making bt*N approach the MXU M granularity (~256 rows).
    bt = max(1, min(B // 2 if B > 1 else 1, pl.cdiv(256, N)))
    # Prefer a bt that divides B (avoids padded tail blocks).
    while bt > 1 and B % bt != 0:
        bt -= 1
    # Conservative per-step VMEM cap (v7x has only 64 MiB physical per TC).
    while bt > 1 and _vmem_bytes_estimate(bt, N, C, H, ape_b, pos_b) > 40 * 2**20:
        bt = max(1, bt // 2)
    return bt


def self_attention(x, q_ape, k_ape, attn_pos, params, *, num_heads, batch_block=None):
    """x: (B,N,C); q_ape/k_ape: (1 or B, N, C) or None; attn_pos: (1 or B, H, N, N) or None."""
    B, N, C = x.shape
    H = num_heads
    assert C % H == 0
    D = C // H
    scale = D ** (-0.5)

    f32 = jnp.float32
    bf16 = jnp.bfloat16

    x = x.astype(f32)
    if q_ape is None:
        q_ape = jnp.zeros((1, N, C), f32)
    if k_ape is None:
        k_ape = jnp.zeros((1, N, C), f32)
    if attn_pos is None:
        attn_pos = jnp.zeros((1, H, N, N), f32)
    q_ape = q_ape.astype(f32)
    k_ape = k_ape.astype(f32)
    attn_pos = attn_pos.astype(f32)

    # PyTorch Linear weights are (out, in): pre-transpose to (in, out), cast the
    # MXU operands to bf16 (f32 accumulation happens in-kernel) and fold the
    # attention scale into Wq.
    wq_t = (params["wq"].astype(f32).T * scale).astype(bf16)   # (C, C)
    wk_t = params["wk"].astype(f32).T.astype(bf16)             # (C, C)
    wv_t = params["wv"].astype(f32).T.astype(bf16)             # (C, C)
    wp_t = params["wp"].astype(f32).T.astype(bf16)             # (C, C)
    bp = params["bp"].astype(f32).reshape(1, C)

    if batch_block is None:
        bt = _pick_batch_block(B, N, C, H, q_ape.shape[0], attn_pos.shape[0])
    else:
        bt = max(1, min(batch_block, B))

    # Positional inputs keep their natural batch extent; a constant batch index
    # in the BlockSpec lets Pallas reuse the block across the batch grid axis.
    if q_ape.shape[0] == 1:
        qape_spec = pl.BlockSpec((1, N, C), lambda b: (0, 0, 0))
    else:
        qape_spec = pl.BlockSpec((bt, N, C), lambda b: (b, 0, 0))
    if k_ape.shape[0] == 1:
        kape_spec = pl.BlockSpec((1, N, C), lambda b: (0, 0, 0))
    else:
        kape_spec = pl.BlockSpec((bt, N, C), lambda b: (b, 0, 0))
    if attn_pos.shape[0] == 1:
        pos_spec = pl.BlockSpec((1, H, N, N), lambda b: (0, 0, 0, 0))
    else:
        pos_spec = pl.BlockSpec((bt, H, N, N), lambda b: (b, 0, 0, 0))

    grid = (pl.cdiv(B, bt),)
    vmem_limit = int(min(48 * 2 ** 20,
                         max(16 * 2 ** 20,
                             2 * _vmem_bytes_estimate(bt, N, C, H,
                                                      q_ape.shape[0],
                                                      attn_pos.shape[0]))))

    return pl.pallas_call(
        _self_attention_kernel,
        out_shape=jax.ShapeDtypeStruct((B, N, C), f32),
        grid_spec=pltpu.PrefetchScalarGridSpec(
            num_scalar_prefetch=0,
            grid=grid,
            in_specs=[
                pl.BlockSpec((bt, N, C), lambda b: (b, 0, 0)),   # x
                qape_spec,                                       # q_ape
                kape_spec,                                       # k_ape
                pos_spec,                                        # attn_pos (all heads)
                pl.BlockSpec((C, C), lambda b: (0, 0)),          # Wq (scaled, bf16)
                pl.BlockSpec((C, C), lambda b: (0, 0)),          # Wk
                pl.BlockSpec((C, C), lambda b: (0, 0)),          # Wv
                pl.BlockSpec((C, C), lambda b: (0, 0)),          # Wproj
                pl.BlockSpec((1, C), lambda b: (0, 0)),          # proj bias
            ],
            out_specs=pl.BlockSpec((bt, N, C), lambda b: (b, 0, 0)),
            scratch_shapes=[pltpu.VMEM((bt * N, C), jnp.bfloat16)
                            for _ in range(4)],                  # q/k/v/ctx
        ),
        compiler_params=pltpu.CompilerParams(
            dimension_semantics=("parallel",),
            vmem_limit_bytes=vmem_limit,
        ),
    )(x, q_ape, k_ape, attn_pos, wq_t, wk_t, wv_t, wp_t, bp)


def self_attention_ref(x, q_ape, k_ape, attn_pos, params, *, num_heads):
    """Pure-JAX (f32) reference mirroring the PyTorch forward."""
    B, N, C = x.shape
    H = num_heads
    D = C // H
    scale = D ** (-0.5)
    q = (x + q_ape) @ params["wq"].T
    k = (x + k_ape) @ params["wk"].T
    v = x @ params["wv"].T
    q = q.reshape(B, N, H, D).transpose(0, 2, 1, 3)
    k = k.reshape(B, N, H, D).transpose(0, 2, 1, 3)
    v = v.reshape(B, N, H, D).transpose(0, 2, 1, 3)
    attn = (q @ jnp.swapaxes(k, -2, -1)) * scale + attn_pos
    attn = jax.nn.softmax(attn, axis=-1)
    out = (attn @ v).transpose(0, 2, 1, 3).reshape(B, N, C)
    return out @ params["wp"].T + params["bp"]


if __name__ == "__main__":
    B, N, C, H = 2, 16, 32, 4   # batch, seq len, dim, num_heads (head_dim = 8)

    key = jax.random.PRNGKey(0)
    keys = jax.random.split(key, 9)
    x        = jax.random.normal(keys[0], (B, N, C), jnp.float32)
    q_ape    = jax.random.normal(keys[1], (1, N, C), jnp.float32)
    k_ape    = jax.random.normal(keys[2], (1, N, C), jnp.float32)
    attn_pos = jax.random.normal(keys[3], (1, H, N, N), jnp.float32)

    s = 1.0 / jnp.sqrt(C)
    params = {
        "wq": jax.random.normal(keys[4], (C, C), jnp.float32) * s,
        "wk": jax.random.normal(keys[5], (C, C), jnp.float32) * s,
        "wv": jax.random.normal(keys[6], (C, C), jnp.float32) * s,
        "wp": jax.random.normal(keys[7], (C, C), jnp.float32) * s,
        "bp": jax.random.normal(keys[8], (C,), jnp.float32) * 0.1,
    }

    out = self_attention(x, q_ape, k_ape, attn_pos, params, num_heads=H)
    out = jax.block_until_ready(out)

    ref = self_attention_ref(x, q_ape, k_ape, attn_pos, params, num_heads=H)
    assert out.shape == (B, N, C)
    # Softmax is exact f32; the remaining error comes from bf16 MXU operands
    # (f32 accumulation), hence the relaxed tolerance vs the f32 reference.
    assert jnp.allclose(out, ref, atol=5e-2, rtol=5e-2), "mismatch vs reference"

    print("KERNEL_OK")
</pallas_src>

<mosaic_0001>
module attributes {stable_mosaic.version = 11 : i64} {
  func.func @_self_attention_kernel(%arg0: i32, %arg1: memref<1x16x32xf32, #tpu.memory_space<vmem>>, %arg2: memref<1x16x32xf32, #tpu.memory_space<vmem>>, %arg3: memref<1x16x32xf32, #tpu.memory_space<vmem>>, %arg4: memref<1x4x16x16xf32, #tpu.memory_space<vmem>>, %arg5: memref<32x32xbf16, #tpu.memory_space<vmem>>, %arg6: memref<32x32xbf16, #tpu.memory_space<vmem>>, %arg7: memref<32x32xbf16, #tpu.memory_space<vmem>>, %arg8: memref<32x32xbf16, #tpu.memory_space<vmem>>, %arg9: memref<1x32xf32, #tpu.memory_space<vmem>>, %arg10: memref<1x16x32xf32, #tpu.memory_space<vmem>>, %arg11: memref<16x32xbf16, #tpu.memory_space<vmem>>, %arg12: memref<16x32xbf16, #tpu.memory_space<vmem>>, %arg13: memref<16x32xbf16, #tpu.memory_space<vmem>>, %arg14: memref<16x32xbf16, #tpu.memory_space<vmem>>) attributes {dimension_semantics = [#tpu.dimension_semantics<parallel>], iteration_bounds = array<i64: 2>, scalar_prefetch = 0 : i64, scratch_operands = 4 : i64, tpu.core_type = #tpu.core_type<tc>, window_params = [{transform_indices = @transform_0, window_bounds = array<i64: 1, 16, 32>}, {pipeline_mode = #tpu.pipeline_mode<synchronous>, transform_indices = @transform_1, window_bounds = array<i64: 1, 16, 32>}, {pipeline_mode = #tpu.pipeline_mode<synchronous>, transform_indices = @transform_2, window_bounds = array<i64: 1, 16, 32>}, {pipeline_mode = #tpu.pipeline_mode<synchronous>, transform_indices = @transform_3, window_bounds = array<i64: 1, 4, 16, 16>}, {pipeline_mode = #tpu.pipeline_mode<synchronous>, transform_indices = @transform_4, window_bounds = array<i64: 32, 32>}, {pipeline_mode = #tpu.pipeline_mode<synchronous>, transform_indices = @transform_5, window_bounds = array<i64: 32, 32>}, {pipeline_mode = #tpu.pipeline_mode<synchronous>, transform_indices = @transform_6, window_bounds = array<i64: 32, 32>}, {pipeline_mode = #tpu.pipeline_mode<synchronous>, transform_indices = @transform_7, window_bounds = array<i64: 32, 32>}, {pipeline_mode = #tpu.pipeline_mode<synchronous>, transform_indices = @transform_8, window_bounds = array<i64: 1, 32>}, {transform_indices = @transform_9, window_bounds = array<i64: 1, 16, 32>}]} {
    %c0 = arith.constant 0 : index
    %c0_0 = arith.constant 0 : index
    %c0_1 = arith.constant 0 : index
    %0 = vector.load %arg1[%c0, %c0_0, %c0_1] : memref<1x16x32xf32, #tpu.memory_space<vmem>>, vector<1x16x32xf32>
    %c0_2 = arith.constant 0 : index
    %c0_3 = arith.constant 0 : index
    %c0_4 = arith.constant 0 : index
    %1 = vector.load %arg2[%c0_2, %c0_3, %c0_4] : memref<1x16x32xf32, #tpu.memory_space<vmem>>, vector<1x16x32xf32>
    %2 = arith.addf %0, %1 : vector<1x16x32xf32>
    %3 = vector.shape_cast %2 : vector<1x16x32xf32> to vector<16x32xf32>
    %4 = arith.truncf %3 : vector<16x32xf32> to vector<16x32xbf16>
    %c0_5 = arith.constant 0 : index
    %c0_6 = arith.constant 0 : index
    %c0_7 = arith.constant 0 : index
    %5 = vector.load %arg3[%c0_5, %c0_6, %c0_7] : memref<1x16x32xf32, #tpu.memory_space<vmem>>, vector<1x16x32xf32>
    %6 = arith.addf %0, %5 : vector<1x16x32xf32>
    %7 = vector.shape_cast %6 : vector<1x16x32xf32> to vector<16x32xf32>
    %8 = arith.truncf %7 : vector<16x32xf32> to vector<16x32xbf16>
    %9 = vector.shape_cast %0 : vector<1x16x32xf32> to vector<16x32xf32>
    %10 = arith.truncf %9 : vector<16x32xf32> to vector<16x32xbf16>
    %c0_8 = arith.constant 0 : index
    %c0_9 = arith.constant 0 : index
    %11 = vector.load %arg5[%c0_8, %c0_9] : memref<32x32xbf16, #tpu.memory_space<vmem>>, vector<32x32xbf16>
    %cst = arith.constant dense<0.000000e+00> : vector<16x32xf32>
    %12 = tpu.matmul %4, %11, %cst {dimension_numbers = #tpu.dot_dimension_numbers<[1], [0], [0], [1], [0, 0, 1, 1], [], []>} : vector<16x32xbf16>, vector<32x32xbf16>, vector<16x32xf32> -> vector<16x32xf32>
    %13 = arith.truncf %12 : vector<16x32xf32> to vector<16x32xbf16>
    %c0_10 = arith.constant 0 : index
    %c0_11 = arith.constant 0 : index
    %14 = vector.load %arg11[%c0_10, %c0_11] : memref<16x32xbf16, #tpu.memory_space<vmem>>, vector<16x32xbf16>
    tpu.vector_store %arg11[%c0_10, %c0_11], %13 {strides = array<i32>} : memref<16x32xbf16, #tpu.memory_space<vmem>>, vector<16x32xbf16>,
    %c0_12 = arith.constant 0 : index
    %c0_13 = arith.constant 0 : index
    %15 = vector.load %arg6[%c0_12, %c0_13] : memref<32x32xbf16, #tpu.memory_space<vmem>>, vector<32x32xbf16>
    %cst_14 = arith.constant dense<0.000000e+00> : vector<16x32xf32>
    %16 = tpu.matmul %8, %15, %cst_14 {dimension_numbers = #tpu.dot_dimension_numbers<[1], [0], [0], [1], [0, 0, 1, 1], [], []>} : vector<16x32xbf16>, vector<32x32xbf16>, vector<16x32xf32> -> vector<16x32xf32>
    %17 = arith.truncf %16 : vector<16x32xf32> to vector<16x32xbf16>
    %c0_15 = arith.constant 0 : index
    %c0_16 = arith.constant 0 : index
    %18 = vector.load %arg12[%c0_15, %c0_16] : memref<16x32xbf16, #tpu.memory_space<vmem>>, vector<16x32xbf16>
    tpu.vector_store %arg12[%c0_15, %c0_16], %17 {strides = array<i32>} : memref<16x32xbf16, #tpu.memory_space<vmem>>, vector<16x32xbf16>,
    %c0_17 = arith.constant 0 : index
    %c0_18 = arith.constant 0 : index
    %19 = vector.load %arg7[%c0_17, %c0_18] : memref<32x32xbf16, #tpu.memory_space<vmem>>, vector<32x32xbf16>
    %cst_19 = arith.constant dense<0.000000e+00> : vector<16x32xf32>
    %20 = tpu.matmul %10, %19, %cst_19 {dimension_numbers = #tpu.dot_dimension_numbers<[1], [0], [0], [1], [0, 0, 1, 1], [], []>} : vector<16x32xbf16>, vector<32x32xbf16>, vector<16x32xf32> -> vector<16x32xf32>
    %21 = arith.truncf %20 : vector<16x32xf32> to vector<16x32xbf16>
    %c0_20 = arith.constant 0 : index
    %c0_21 = arith.constant 0 : index
    %22 = vector.load %arg13[%c0_20, %c0_21] : memref<16x32xbf16, #tpu.memory_space<vmem>>, vector<16x32xbf16>
    tpu.vector_store %arg13[%c0_20, %c0_21], %21 {strides = array<i32>} : memref<16x32xbf16, #tpu.memory_space<vmem>>, vector<16x32xbf16>,
    %c0_22 = arith.constant 0 : index
    %c0_23 = arith.constant 0 : index
    %23 = vector.load %arg11[%c0_22, %c0_23] : memref<16x32xbf16, #tpu.memory_space<vmem>>, vector<16x8xbf16>
    %24 = vector.shape_cast %23 : vector<16x8xbf16> to vector<1x16x8xbf16>
    %c0_24 = arith.constant 0 : index
    %c0_25 = arith.constant 0 : index
    %25 = vector.load %arg12[%c0_24, %c0_25] : memref<16x32xbf16, #tpu.memory_space<vmem>>, vector<16x8xbf16>
    %26 = vector.shape_cast %25 : vector<16x8xbf16> to vector<1x16x8xbf16>
    %c0_26 = arith.constant 0 : index
    %c0_27 = arith.constant 0 : index
    %27 = vector.load %arg13[%c0_26, %c0_27] : memref<16x32xbf16, #tpu.memory_space<vmem>>, vector<16x8xbf16>
    %28 = vector.shape_cast %27 : vector<16x8xbf16> to vector<1x16x8xbf16>
    "tpu.trace_start"() <{level = 10 : i32, message = "bqd,bkd->bqk"}> : () -> ()
    %cst_28 = arith.constant dense<0.000000e+00> : vector<1x16x16xf32>
    %29 = tpu.matmul %24, %26, %cst_28 {dimension_numbers = #tpu.dot_dimension_numbers<[2], [2], [1], [1], [0, 0, 0, 1, 1, 1], [0], [0]>} : vector<1x16x8xbf16>, vector<1x16x8xbf16>, vector<1x16x16xf32> -> vector<1x16x16xf32>
    "tpu.trace_stop"() : () -> ()
    %c0_29 = arith.constant 0 : index
    %c0_30 = arith.constant 0 : index
    %c0_31 = arith.constant 0 : index
    %c0_32 = arith.constant 0 : index
    %30 = vector.load %arg4[%c0_29, %c0_30, %c0_31, %c0_32] : memref<1x4x16x16xf32, #tpu.memory_space<vmem>>, vector<1x1x16x16xf32>
    %31 = vector.shape_cast %30 : vector<1x1x16x16xf32> to vector<1x16x16xf32>
    %32 = arith.addf %29, %31 : vector<1x16x16xf32>
    %cst_33 = arith.constant dense<0xFF800000> : vector<1x16xf32>
    %33 = vector.multi_reduction <maximumf>, %32, %cst_33 [2] : vector<1x16x16xf32> to vector<1x16xf32>
    %34 = vector.shape_cast %33 : vector<1x16xf32> to vector<1x16x1xf32>
    %35 = vector.broadcast %34 : vector<1x16x1xf32> to vector<1x16x16xf32>
    %36 = arith.subf %32, %35 : vector<1x16x16xf32>
    %37 = math.exp %36 : vector<1x16x16xf32>
    %cst_34 = arith.constant dense<0.000000e+00> : vector<1x16xf32>
    %38 = vector.multi_reduction <add>, %37, %cst_34 [2] : vector<1x16x16xf32> to vector<1x16xf32>
    %39 = vector.shape_cast %38 : vector<1x16xf32> to vector<1x16x1xf32>
    %40 = vector.broadcast %39 : vector<1x16x1xf32> to vector<1x16x16xf32>
    %41 = arith.divf %37, %40 : vector<1x16x16xf32>
    %42 = arith.truncf %41 : vector<1x16x16xf32> to vector<1x16x16xbf16>
    "tpu.trace_start"() <{level = 10 : i32, message = "bqk,bkd->bqd"}> : () -> ()
    %cst_35 = arith.constant dense<0.000000e+00> : vector<1x16x8xf32>
    %43 = tpu.matmul %42, %28, %cst_35 {dimension_numbers = #tpu.dot_dimension_numbers<[2], [1], [1], [2], [0, 0, 0, 1, 1, 2], [0], [0]>} : vector<1x16x16xbf16>, vector<1x16x8xbf16>, vector<1x16x8xf32> -> vector<1x16x8xf32>
    "tpu.trace_stop"() : () -> ()
    %44 = vector.shape_cast %43 : vector<1x16x8xf32> to vector<16x8xf32>
    %45 = arith.truncf %44 : vector<16x8xf32> to vector<16x8xbf16>
    %c0_36 = arith.constant 0 : index
    %c0_37 = arith.constant 0 : index
    %46 = vector.load %arg14[%c0_36, %c0_37] : memref<16x32xbf16, #tpu.memory_space<vmem>>, vector<16x8xbf16>
    tpu.vector_store %arg14[%c0_36, %c0_37], %45 {strides = array<i32>} : memref<16x32xbf16, #tpu.memory_space<vmem>>, vector<16x8xbf16>,
    %c0_38 = arith.constant 0 : index
    %c8 = arith.constant 8 : index
    %47 = vector.load %arg11[%c0_38, %c8] : memref<16x32xbf16, #tpu.memory_space<vmem>>, vector<16x8xbf16>
    %48 = vector.shape_cast %47 : vector<16x8xbf16> to vector<1x16x8xbf16>
    %c0_39 = arith.constant 0 : index
    %c8_40 = arith.constant 8 : index
    %49 = vector.load %arg12[%c0_39, %c8_40] : memref<16x32xbf16, #tpu.memory_space<vmem>>, vector<16x8xbf16>
    %50 = vector.shape_cast %49 : vector<16x8xbf16> to vector<1x16x8xbf16>
    %c0_41 = arith.constant 0 : index
    %c8_42 = arith.constant 8 : index
    %51 = vector.load %arg13[%c0_41, %c8_42] : memref<16x32xbf16, #tpu.memory_space<vmem>>, vector<16x8xbf16>
    %52 = vector.shape_cast %51 : vector<16x8xbf16> to vector<1x16x8xbf16>
    "tpu.trace_start"() <{level = 10 : i32, message = "bqd,bkd->bqk"}> : () -> ()
    %cst_43 = arith.constant dense<0.000000e+00> : vector<1x16x16xf32>
    %53 = tpu.matmul %48, %50, %cst_43 {dimension_numbers = #tpu.dot_dimension_numbers<[2], [2], [1], [1], [0, 0, 0, 1, 1, 1], [0], [0]>} : vector<1x16x8xbf16>, vector<1x16x8xbf16>, vector<1x16x16xf32> -> vector<1x16x16xf32>
    "tpu.trace_stop"() : () -> ()
    %c0_44 = arith.constant 0 : index
    %c1 = arith.constant 1 : index
    %c0_45 = arith.constant 0 : index
    %c0_46 = arith.constant 0 : index
    %54 = vector.load %arg4[%c0_44, %c1, %c0_45, %c0_46] : memref<1x4x16x16xf32, #tpu.memory_space<vmem>>, vector<1x1x16x16xf32>
    %55 = vector.shape_cast %54 : vector<1x1x16x16xf32> to vector<1x16x16xf32>
    %56 = arith.addf %53, %55 : vector<1x16x16xf32>
    %cst_47 = arith.constant dense<0xFF800000> : vector<1x16xf32>
    %57 = vector.multi_reduction <maximumf>, %56, %cst_47 [2] : vector<1x16x16xf32> to vector<1x16xf32>
    %58 = vector.shape_cast %57 : vector<1x16xf32> to vector<1x16x1xf32>
    %59 = vector.broadcast %58 : vector<1x16x1xf32> to vector<1x16x16xf32>
    %60 = arith.subf %56, %59 : vector<1x16x16xf32>
    %61 = math.exp %60 : vector<1x16x16xf32>
    %cst_48 = arith.constant dense<0.000000e+00> : vector<1x16xf32>
    %62 = vector.multi_reduction <add>, %61, %cst_48 [2] : vector<1x16x16xf32> to vector<1x16xf32>
    %63 = vector.shape_cast %62 : vector<1x16xf32> to vector<1x16x1xf32>
    %64 = vector.broadcast %63 : vector<1x16x1xf32> to vector<1x16x16xf32>
    %65 = arith.divf %61, %64 : vector<1x16x16xf32>
    %66 = arith.truncf %65 : vector<1x16x16xf32> to vector<1x16x16xbf16>
    "tpu.trace_start"() <{level = 10 : i32, message = "bqk,bkd->bqd"}> : () -> ()
    %cst_49 = arith.constant dense<0.000000e+00> : vector<1x16x8xf32>
    %67 = tpu.matmul %66, %52, %cst_49 {dimension_numbers = #tpu.dot_dimension_numbers<[2], [1], [1], [2], [0, 0, 0, 1, 1, 2], [0], [0]>} : vector<1x16x16xbf16>, vector<1x16x8xbf16>, vector<1x16x8xf32> -> vector<1x16x8xf32>
    "tpu.trace_stop"() : () -> ()
    %68 = vector.shape_cast %67 : vector<1x16x8xf32> to vector<16x8xf32>
    %69 = arith.truncf %68 : vector<16x8xf32> to vector<16x8xbf16>
    %c0_50 = arith.constant 0 : index
    %c8_51 = arith.constant 8 : index
    %70 = vector.load %arg14[%c0_50, %c8_51] : memref<16x32xbf16, #tpu.memory_space<vmem>>, vector<16x8xbf16>
    tpu.vector_store %arg14[%c0_50, %c8_51], %69 {strides = array<i32>} : memref<16x32xbf16, #tpu.memory_space<vmem>>, vector<16x8xbf16>,
    %c0_52 = arith.constant 0 : index
    %c16 = arith.constant 16 : index
    %71 = vector.load %arg11[%c0_52, %c16] : memref<16x32xbf16, #tpu.memory_space<vmem>>, vector<16x8xbf16>
    %72 = vector.shape_cast %71 : vector<16x8xbf16> to vector<1x16x8xbf16>
    %c0_53 = arith.constant 0 : index
    %c16_54 = arith.constant 16 : index
    %73 = vector.load %arg12[%c0_53, %c16_54] : memref<16x32xbf16, #tpu.memory_space<vmem>>, vector<16x8xbf16>
    %74 = vector.shape_cast %73 : vector<16x8xbf16> to vector<1x16x8xbf16>
    %c0_55 = arith.constant 0 : index
    %c16_56 = arith.constant 16 : index
    %75 = vector.load %arg13[%c0_55, %c16_56] : memref<16x32xbf16, #tpu.memory_space<vmem>>, vector<16x8xbf16>
    %76 = vector.shape_cast %75 : vector<16x8xbf16> to vector<1x16x8xbf16>
    "tpu.trace_start"() <{level = 10 : i32, message = "bqd,bkd->bqk"}> : () -> ()
    %cst_57 = arith.constant dense<0.000000e+00> : vector<1x16x16xf32>
    %77 = tpu.matmul %72, %74, %cst_57 {dimension_numbers = #tpu.dot_dimension_numbers<[2], [2], [1], [1], [0, 0, 0, 1, 1, 1], [0], [0]>} : vector<1x16x8xbf16>, vector<1x16x8xbf16>, vector<1x16x16xf32> -> vector<1x16x16xf32>
    "tpu.trace_stop"() : () -> ()
    %c0_58 = arith.constant 0 : index
    %c2 = arith.constant 2 : index
    %c0_59 = arith.constant 0 : index
    %c0_60 = arith.constant 0 : index
    %78 = vector.load %arg4[%c0_58, %c2, %c0_59, %c0_60] : memref<1x4x16x16xf32, #tpu.memory_space<vmem>>, vector<1x1x16x16xf32>
    %79 = vector.shape_cast %78 : vector<1x1x16x16xf32> to vector<1x16x16xf32>
    %80 = arith.addf %77, %79 : vector<1x16x16xf32>
    %cst_61 = arith.constant dense<0xFF800000> : vector<1x16xf32>
    %81 = vector.multi_reduction <maximumf>, %80, %cst_61 [2] : vector<1x16x16xf32> to vector<1x16xf32>
    %82 = vector.shape_cast %81 : vector<1x16xf32> to vector<1x16x1xf32>
    %83 = vector.broadcast %82 : vector<1x16x1xf32> to vector<1x16x16xf32>
    %84 = arith.subf %80, %83 : vector<1x16x16xf32>
    %85 = math.exp %84 : vector<1x16x16xf32>
    %cst_62 = arith.constant dense<0.000000e+00> : vector<1x16xf32>
    %86 = vector.multi_reduction <add>, %85, %cst_62 [2] : vector<1x16x16xf32> to vector<1x16xf32>
    %87 = vector.shape_cast %86 : vector<1x16xf32> to vector<1x16x1xf32>
    %88 = vector.broadcast %87 : vector<1x16x1xf32> to vector<1x16x16xf32>
    %89 = arith.divf %85, %88 : vector<1x16x16xf32>
    %90 = arith.truncf %89 : vector<1x16x16xf32> to vector<1x16x16xbf16>
    "tpu.trace_start"() <{level = 10 : i32, message = "bqk,bkd->bqd"}> : () -> ()
    %cst_63 = arith.constant dense<0.000000e+00> : vector<1x16x8xf32>
    %91 = tpu.matmul %90, %76, %cst_63 {dimension_numbers = #tpu.dot_dimension_numbers<[2], [1], [1], [2], [0, 0, 0, 1, 1, 2], [0], [0]>} : vector<1x16x16xbf16>, vector<1x16x8xbf16>, vector<1x16x8xf32> -> vector<1x16x8xf32>
    "tpu.trace_stop"() : () -> ()
    %92 = vector.shape_cast %91 : vector<1x16x8xf32> to vector<16x8xf32>
    %93 = arith.truncf %92 : vector<16x8xf32> to vector<16x8xbf16>
    %c0_64 = arith.constant 0 : index
    %c16_65 = arith.constant 16 : index
    %94 = vector.load %arg14[%c0_64, %c16_65] : memref<16x32xbf16, #tpu.memory_space<vmem>>, vector<16x8xbf16>
    tpu.vector_store %arg14[%c0_64, %c16_65], %93 {strides = array<i32>} : memref<16x32xbf16, #tpu.memory_space<vmem>>, vector<16x8xbf16>,
    %c0_66 = arith.constant 0 : index
    %c24 = arith.constant 24 : index
    %95 = vector.load %arg11[%c0_66, %c24] : memref<16x32xbf16, #tpu.memory_space<vmem>>, vector<16x8xbf16>
    %96 = vector.shape_cast %95 : vector<16x8xbf16> to vector<1x16x8xbf16>
    %c0_67 = arith.constant 0 : index
    %c24_68 = arith.constant 24 : index
    %97 = vector.load %arg12[%c0_67, %c24_68] : memref<16x32xbf16, #tpu.memory_space<vmem>>, vector<16x8xbf16>
    %98 = vector.shape_cast %97 : vector<16x8xbf16> to vector<1x16x8xbf16>
    %c0_69 = arith.constant 0 : index
    %c24_70 = arith.constant 24 : index
    %99 = vector.load %arg13[%c0_69, %c24_70] : memref<16x32xbf16, #tpu.memory_space<vmem>>, vector<16x8xbf16>
    %100 = vector.shape_cast %99 : vector<16x8xbf16> to vector<1x16x8xbf16>
    "tpu.trace_start"() <{level = 10 : i32, message = "bqd,bkd->bqk"}> : () -> ()
    %cst_71 = arith.constant dense<0.000000e+00> : vector<1x16x16xf32>
    %101 = tpu.matmul %96, %98, %cst_71 {dimension_numbers = #tpu.dot_dimension_numbers<[2], [2], [1], [1], [0, 0, 0, 1, 1, 1], [0], [0]>} : vector<1x16x8xbf16>, vector<1x16x8xbf16>, vector<1x16x16xf32> -> vector<1x16x16xf32>
    "tpu.trace_stop"() : () -> ()
    %c0_72 = arith.constant 0 : index
    %c3 = arith.constant 3 : index
    %c0_73 = arith.constant 0 : index
    %c0_74 = arith.constant 0 : index
    %102 = vector.load %arg4[%c0_72, %c3, %c0_73, %c0_74] : memref<1x4x16x16xf32, #tpu.memory_space<vmem>>, vector<1x1x16x16xf32>
    %103 = vector.shape_cast %102 : vector<1x1x16x16xf32> to vector<1x16x16xf32>
    %104 = arith.addf %101, %103 : vector<1x16x16xf32>
    %cst_75 = arith.constant dense<0xFF800000> : vector<1x16xf32>
    %105 = vector.multi_reduction <maximumf>, %104, %cst_75 [2] : vector<1x16x16xf32> to vector<1x16xf32>
    %106 = vector.shape_cast %105 : vector<1x16xf32> to vector<1x16x1xf32>
    %107 = vector.broadcast %106 : vector<1x16x1xf32> to vector<1x16x16xf32>
    %108 = arith.subf %104, %107 : vector<1x16x16xf32>
    %109 = math.exp %108 : vector<1x16x16xf32>
    %cst_76 = arith.constant dense<0.000000e+00> : vector<1x16xf32>
    %110 = vector.multi_reduction <add>, %109, %cst_76 [2] : vector<1x16x16xf32> to vector<1x16xf32>
    %111 = vector.shape_cast %110 : vector<1x16xf32> to vector<1x16x1xf32>
    %112 = vector.broadcast %111 : vector<1x16x1xf32> to vector<1x16x16xf32>
    %113 = arith.divf %109, %112 : vector<1x16x16xf32>
    %114 = arith.truncf %113 : vector<1x16x16xf32> to vector<1x16x16xbf16>
    "tpu.trace_start"() <{level = 10 : i32, message = "bqk,bkd->bqd"}> : () -> ()
    %cst_77 = arith.constant dense<0.000000e+00> : vector<1x16x8xf32>
    %115 = tpu.matmul %114, %100, %cst_77 {dimension_numbers = #tpu.dot_dimension_numbers<[2], [1], [1], [2], [0, 0, 0, 1, 1, 2], [0], [0]>} : vector<1x16x16xbf16>, vector<1x16x8xbf16>, vector<1x16x8xf32> -> vector<1x16x8xf32>
    "tpu.trace_stop"() : () -> ()
    %116 = vector.shape_cast %115 : vector<1x16x8xf32> to vector<16x8xf32>
    %117 = arith.truncf %116 : vector<16x8xf32> to vector<16x8xbf16>
    %c0_78 = arith.constant 0 : index
    %c24_79 = arith.constant 24 : index
    %118 = vector.load %arg14[%c0_78, %c24_79] : memref<16x32xbf16, #tpu.memory_space<vmem>>, vector<16x8xbf16>
    tpu.vector_store %arg14[%c0_78, %c24_79], %117 {strides = array<i32>} : memref<16x32xbf16, #tpu.memory_space<vmem>>, vector<16x8xbf16>,
    %c0_80 = arith.constant 0 : index
    %c0_81 = arith.constant 0 : index
    %119 = vector.load %arg14[%c0_80, %c0_81] : memref<16x32xbf16, #tpu.memory_space<vmem>>, vector<16x32xbf16>
    %c0_82 = arith.constant 0 : index
    %c0_83 = arith.constant 0 : index
    %120 = vector.load %arg8[%c0_82, %c0_83] : memref<32x32xbf16, #tpu.memory_space<vmem>>, vector<32x32xbf16>
    %cst_84 = arith.constant dense<0.000000e+00> : vector<16x32xf32>
    %121 = tpu.matmul %119, %120, %cst_84 {dimension_numbers = #tpu.dot_dimension_numbers<[1], [0], [0], [1], [0, 0, 1, 1], [], []>} : vector<16x32xbf16>, vector<32x32xbf16>, vector<16x32xf32> -> vector<16x32xf32>
    %122 = vector.shape_cast %121 : vector<16x32xf32> to vector<1x16x32xf32>
    %c0_85 = arith.constant 0 : index
    %c0_86 = arith.constant 0 : index
    %123 = vector.load %arg9[%c0_85, %c0_86] : memref<1x32xf32, #tpu.memory_space<vmem>>, vector<1x32xf32>
    %124 = vector.shape_cast %123 : vector<1x32xf32> to vector<1x1x32xf32>
    %125 = vector.broadcast %124 : vector<1x1x32xf32> to vector<1x16x32xf32>
    %126 = arith.addf %122, %125 : vector<1x16x32xf32>
    %c0_87 = arith.constant 0 : index
    %c0_88 = arith.constant 0 : index
    %c0_89 = arith.constant 0 : index
    %127 = vector.load %arg10[%c0_87, %c0_88, %c0_89] : memref<1x16x32xf32, #tpu.memory_space<vmem>>, vector<1x16x32xf32>
    tpu.vector_store %arg10[%c0_87, %c0_88, %c0_89], %126 {strides = array<i32>} : memref<1x16x32xf32, #tpu.memory_space<vmem>>, vector<1x16x32xf32>,
    return
  }
  func.func @transform_0(%arg0: i32) -> (i32, i32, i32) {
    %c0_i32 = arith.constant 0 : i32
    %c0_i32_0 = arith.constant 0 : i32
    %c0_i32_1 = arith.constant 0 : i32
    return %arg0, %c0_i32, %c0_i32_0 : i32, i32, i32
  }
  func.func @transform_1(%arg0: i32) -> (i32, i32, i32) {
    %c0_i32 = arith.constant 0 : i32
    %c0_i32_0 = arith.constant 0 : i32
    %c0_i32_1 = arith.constant 0 : i32
    %c0_i32_2 = arith.constant 0 : i32
    return %c0_i32, %c0_i32_0, %c0_i32_1 : i32, i32, i32
  }
  func.func @transform_2(%arg0: i32) -> (i32, i32, i32) {
    %c0_i32 = arith.constant 0 : i32
    %c0_i32_0 = arith.constant 0 : i32
    %c0_i32_1 = arith.constant 0 : i32
    %c0_i32_2 = arith.constant 0 : i32
    return %c0_i32, %c0_i32_0, %c0_i32_1 : i32, i32, i32
  }
  func.func @transform_3(%arg0: i32) -> (i32, i32, i32, i32) {
    %c0_i32 = arith.constant 0 : i32
    %c0_i32_0 = arith.constant 0 : i32
    %c0_i32_1 = arith.constant 0 : i32
    %c0_i32_2 = arith.constant 0 : i32
    %c0_i32_3 = arith.constant 0 : i32
    return %c0_i32, %c0_i32_0, %c0_i32_1, %c0_i32_2 : i32, i32, i32, i32
  }
  func.func @transform_4(%arg0: i32) -> (i32, i32) {
    %c0_i32 = arith.constant 0 : i32
    %c0_i32_0 = arith.constant 0 : i32
    %c0_i32_1 = arith.constant 0 : i32
    return %c0_i32, %c0_i32_0 : i32, i32
  }
  func.func @transform_5(%arg0: i32) -> (i32, i32) {
    %c0_i32 = arith.constant 0 : i32
    %c0_i32_0 = arith.constant 0 : i32
    %c0_i32_1 = arith.constant 0 : i32
    return %c0_i32, %c0_i32_0 : i32, i32
  }
  func.func @transform_6(%arg0: i32) -> (i32, i32) {
    %c0_i32 = arith.constant 0 : i32
    %c0_i32_0 = arith.constant 0 : i32
    %c0_i32_1 = arith.constant 0 : i32
    return %c0_i32, %c0_i32_0 : i32, i32
  }
  func.func @transform_7(%arg0: i32) -> (i32, i32) {
    %c0_i32 = arith.constant 0 : i32
    %c0_i32_0 = arith.constant 0 : i32
    %c0_i32_1 = arith.constant 0 : i32
    return %c0_i32, %c0_i32_0 : i32, i32
  }
  func.func @transform_8(%arg0: i32) -> (i32, i32) {
    %c0_i32 = arith.constant 0 : i32
    %c0_i32_0 = arith.constant 0 : i32
    %c0_i32_1 = arith.constant 0 : i32
    return %c0_i32, %c0_i32_0 : i32, i32
  }
  func.func @transform_9(%arg0: i32) -> (i32, i32, i32) {
    %c0_i32 = arith.constant 0 : i32
    %c0_i32_0 = arith.constant 0 : i32
    %c0_i32_1 = arith.constant 0 : i32
    return %arg0, %c0_i32, %c0_i32_0 : i32, i32, i32
  }
}

</mosaic_0001>

<llo_original>
// kernel: tpu_custom_call.1
$region0: #{tpu_custom_call.1}
  #allocation0 [shape = 'u32[]', space=smem, size = 0x4, offset = 0x4, fixed_abs, tag = 'smem constant byte address 0x4 - core index']
  #allocation1 [shape = 'u32[144,128]{1,0:T(1,128)}', space=vmem, size = 0x12000, scoped, tag = 'internal scratch']
  #allocation2 [shape = 'bf16[16,32]{1,0:T(16,128)(2,1)}', space=vmem, size = 0x1000, scoped, tag = 'scratch operand']
  #allocation3 [shape = 'bf16[16,32]{1,0:T(16,128)(2,1)}', space=vmem, size = 0x1000, scoped, tag = 'scratch operand']
  #allocation4 [shape = 'bf16[16,32]{1,0:T(16,128)(2,1)}', space=vmem, size = 0x1000, scoped, tag = 'scratch operand']
  #allocation5 [shape = 'bf16[16,32]{1,0:T(16,128)(2,1)}', space=vmem, size = 0x1000, scoped, tag = 'scratch operand']
  %s0 = inlined_call_operand.hbm [shape: f32[2,16,32], index: 0, kind: input, shape index: {}]
  %s1 = inlined_call_operand.hbm [shape: f32[1,16,32], index: 1, kind: input, shape index: {}]
  %s2 = inlined_call_operand.hbm [shape: f32[1,16,32], index: 2, kind: input, shape index: {}]
  %s3 = inlined_call_operand.hbm [shape: f32[1,4,16,16], index: 3, kind: input, shape index: {}]
  %s4 = inlined_call_operand.hbm [shape: bf16[32,32], index: 4, kind: input, shape index: {}]
  %s5 = inlined_call_operand.vmem [shape: bf16[32,32], index: 5, kind: input, shape index: {}]
  %s6 = inlined_call_operand.hbm [shape: bf16[32,32], index: 6, kind: input, shape index: {}]
  %s7 = inlined_call_operand.hbm [shape: bf16[32,32], index: 7, kind: input, shape index: {}]
  %s8 = inlined_call_operand.vmem [shape: f32[1,32], index: 8, kind: input, shape index: {}]
  %s9 = inlined_call_operand.hbm [shape: f32[2,16,32], index: 9, kind: output, shape index: {}]
  %s10 = sld [smem:[#allocation0]]
  $region97: #{tpu_custom_call.1} parent=0
    _
  %s12 = ssub.s32 1, %s10
  %s13 = scalar_select 0, %s12, %s10
  $region1: #{tpu_custom_call.1} parent=0
    #allocation6 [shape = 'u8[16384]{0}', space=vmem, size = 0x4000, scoped, tag = 'input window, operand 0']
    #allocation7 [shape = 's32[2]{0}', space=sflag, size = 0x8, scoped, tag = 'scoped memory for tpu_custom_call.1']
    #allocation8 [shape = 's32[2]{0}', space=sflag, size = 0x8, scoped, tag = 'scoped memory for tpu_custom_call.1']
    #allocation9 [shape = 'u8[8192]{0}', space=vmem, size = 0x2000, scoped, tag = 'input window, operand 1, single buffered']
    #allocation10 [shape = 's32[1]{0}', space=sflag, size = 0x4, scoped, tag = 'scoped memory for tpu_custom_call.1']
    #allocation11 [shape = 'u8[8192]{0}', space=vmem, size = 0x2000, scoped, tag = 'input window, operand 2, single buffered']
    #allocation12 [shape = 'u8[32768]{0}', space=vmem, size = 0x8000, scoped, tag = 'input window, operand 3, single buffered']
    #allocation13 [shape = 's32[1]{0}', space=sflag, size = 0x4, scoped, tag = 'scoped memory for tpu_custom_call.1']
    #allocation14 [shape = 'u8[8192]{0}', space=vmem, size = 0x2000, scoped, tag = 'input window, operand 4, single buffered']
    #allocation15 [shape = 'u8[8192]{0}', space=vmem, size = 0x2000, scoped, tag = 'input window, operand 6, single buffered']
    #allocation16 [shape = 's32[1]{0}', space=sflag, size = 0x4, scoped, tag = 'scoped memory for tpu_custom_call.1']
    #allocation17 [shape = 'u8[8192]{0}', space=vmem, size = 0x2000, scoped, tag = 'input window, operand 7, single buffered']
    #allocation18 [shape = 'u8[16384]{0}', space=vmem, size = 0x4000, scoped, tag = 'output window, operand 0']
    %14 = vsyncpa [#allocation7], 0
    %s15 = scalar_lea.sflag [#allocation7], 1
    %16 = vsyncpa %s15, 0
    %17 = vsyncpa [#allocation10], 0
    %18 = vsyncpa [#allocation13], 0
    %19 = vsyncpa [#allocation16], 0
    %20 = vsyncpa [#allocation8], 0
    %s21 = scalar_lea.sflag [#allocation8], 1
    %22 = vsyncpa %s21, 0
    loop: start=0, step=1, limit=4
    $region2: #{tpu_custom_call.1} parent=1 // loop_pre_header
      _
    $region3: #{tpu_custom_call.1} parent=1 // loop_header
      %s24 = sphi 0, %s28
      %p25 = scmp.ge.s32.totalorder %s24, 4
      %s34 = sphi 0, %s36
      %s37 = sphi 0, %s34
      %s38 = sphi 0, %s37
      %s54 = sphi 0, %s38
      %s58 = sphi 0, %s58
      %s60 = sphi 0, %s58
      %s61 = sphi 0, %s60
      %s75 = sphi 0, %s61
      %s79 = sphi 0, %s79
      %s81 = sphi 0, %s79
      %s82 = sphi 0, %s81
      %s96 = sphi 0, %s82
      %s100 = sphi 0, %s100
      %s102 = sphi 0, %s100
      %s103 = sphi 0, %s102
      %s117 = sphi 0, %s103
      %s121 = sphi 0, %s121
      %s123 = sphi 0, %s121
      %s124 = sphi 0, %s123
      %s138 = sphi 0, %s124
      %s142 = sphi 0, %s142
      %s144 = sphi 0, %s142
      %s145 = sphi 0, %s144
      %s159 = sphi 0, %s145
      %s163 = sphi 0, %s163
      %s165 = sphi 0, %s163
      %s166 = sphi 0, %s165
      %s180 = sphi 0, %s166
      %s184 = sphi 0, %s184
      %s186 = sphi 0, %s184
      %s187 = sphi 0, %s186
      %s201 = sphi 0, %s187
      %s205 = sphi 0, %s205
      %s207 = sphi 0, %s205
      %s208 = sphi 0, %s207
      %s222 = sphi 0, %s208
      %s228 = sphi 0, %s230
      %s231 = sphi 0, %s228
      %s232 = sphi 0, %s231
      %s248 = sphi 0, %s232
    $region4: #{tpu_custom_call.1} parent=1 // loop_header_branch
      %27 = sbr.rel (%p25) target = $region8
    $region5: #{tpu_custom_call.1} parent=1 // loop_body
      %s29 = ssub.s32 %s24, 1
      %s30 = ssub.s32 %s24, 2
      %s31 = sadd.s32 %s24, 1
      %s32 = ssub.s32 %s24, %s31
      %p33 = scmp.eq.s32.totalorder %s32, 0
      %s35 = sadd.s32 %s34, 1
      %s36 = scalar_select %p33, %s34, %s35
      %p39 = pneg %p33
      %p40 = scmp.eq.s32.totalorder %s24, 1
      %p41 = por %p39, %p40
      %p42 = scmp.ne.s32.totalorder %s34, %s37
      %p43 = scmp.eq.s32.totalorder %s24, 0
      %p44 = por %p42, %p43
      %p45 = scmp.ne.s32.totalorder %s34, %s37
      %p46 = scmp.eq.s32.totalorder %s29, 1
      %p47 = por %p45, %p46
      %p48 = scmp.ne.s32.totalorder %s37, %s38
      %p49 = scmp.eq.s32.totalorder %s29, 0
      %p50 = por %p48, %p49
      %p51 = scmp.ne.s32.totalorder %s37, %s38
      %p52 = scmp.eq.s32.totalorder %s30, 1
      %p53 = por %p51, %p52
      %p55 = scmp.ne.s32.totalorder %s38, %s54
      %p56 = scmp.eq.s32.totalorder %s30, 0
      %p57 = por %p55, %p56
      %s59 = sadd.s32 %s58, 1
      %p62 = scmp.eq.s32.totalorder %s24, 1
      %p63 = scmp.ne.s32.totalorder %s58, %s60
      %p64 = scmp.eq.s32.totalorder %s24, 0
      %p65 = por %p63, %p64
      %p66 = scmp.ne.s32.totalorder %s58, %s60
      %p67 = scmp.eq.s32.totalorder %s29, 1
      %p68 = por %p66, %p67
      %p69 = scmp.ne.s32.totalorder %s60, %s61
      %p70 = scmp.eq.s32.totalorder %s29, 0
      %p71 = por %p69, %p70
      %p72 = scmp.ne.s32.totalorder %s60, %s61
      %p73 = scmp.eq.s32.totalorder %s30, 1
      %p74 = por %p72, %p73
      %p76 = scmp.ne.s32.totalorder %s61, %s75
      %p77 = scmp.eq.s32.totalorder %s30, 0
      %p78 = por %p76, %p77
      %s80 = sadd.s32 %s79, 1
      %p83 = scmp.eq.s32.totalorder %s24, 1
      %p84 = scmp.ne.s32.totalorder %s79, %s81
      %p85 = scmp.eq.s32.totalorder %s24, 0
      %p86 = por %p84, %p85
      %p87 = scmp.ne.s32.totalorder %s79, %s81
      %p88 = scmp.eq.s32.totalorder %s29, 1
      %p89 = por %p87, %p88
      %p90 = scmp.ne.s32.totalorder %s81, %s82
      %p91 = scmp.eq.s32.totalorder %s29, 0
      %p92 = por %p90, %p91
      %p93 = scmp.ne.s32.totalorder %s81, %s82
      %p94 = scmp.eq.s32.totalorder %s30, 1
      %p95 = por %p93, %p94
      %p97 = scmp.ne.s32.totalorder %s82, %s96
      %p98 = scmp.eq.s32.totalorder %s30, 0
      %p99 = por %p97, %p98
      %s101 = sadd.s32 %s100, 1
      %p104 = scmp.eq.s32.totalorder %s24, 1
      %p105 = scmp.ne.s32.totalorder %s100, %s102
      %p106 = scmp.eq.s32.totalorder %s24, 0
      %p107 = por %p105, %p106
      %p108 = scmp.ne.s32.totalorder %s100, %s102
      %p109 = scmp.eq.s32.totalorder %s29, 1
      %p110 = por %p108, %p109
      %p111 = scmp.ne.s32.totalorder %s102, %s103
      %p112 = scmp.eq.s32.totalorder %s29, 0
      %p113 = por %p111, %p112
      %p114 = scmp.ne.s32.totalorder %s102, %s103
      %p115 = scmp.eq.s32.totalorder %s30, 1
      %p116 = por %p114, %p115
      %p118 = scmp.ne.s32.totalorder %s103, %s117
      %p119 = scmp.eq.s32.totalorder %s30, 0
      %p120 = por %p118, %p119
      %s122 = sadd.s32 %s121, 1
      %p125 = scmp.eq.s32.totalorder %s24, 1
      %p126 = scmp.ne.s32.totalorder %s121, %s123
      %p127 = scmp.eq.s32.totalorder %s24, 0
      %p128 = por %p126, %p127
      %p129 = scmp.ne.s32.totalorder %s121, %s123
      %p130 = scmp.eq.s32.totalorder %s29, 1
      %p131 = por %p129, %p130
      %p132 = scmp.ne.s32.totalorder %s123, %s124
      %p133 = scmp.eq.s32.totalorder %s29, 0
      %p134 = por %p132, %p133
      %p135 = scmp.ne.s32.totalorder %s123, %s124
      %p136 = scmp.eq.s32.totalorder %s30, 1
      %p137 = por %p135, %p136
      %p139 = scmp.ne.s32.totalorder %s124, %s138
      %p140 = scmp.eq.s32.totalorder %s30, 0
      %p141 = por %p139, %p140
      %s143 = sadd.s32 %s142, 1
      %p146 = scmp.eq.s32.totalorder %s24, 1
      %p147 = scmp.ne.s32.totalorder %s142, %s144
      %p148 = scmp.eq.s32.totalorder %s24, 0
      %p149 = por %p147, %p148
      %p150 = scmp.ne.s32.totalorder %s142, %s144
      %p151 = scmp.eq.s32.totalorder %s29, 1
      %p152 = por %p150, %p151
      %p153 = scmp.ne.s32.totalorder %s144, %s145
      %p154 = scmp.eq.s32.totalorder %s29, 0
      %p155 = por %p153, %p154
      %p156 = scmp.ne.s32.totalorder %s144, %s145
      %p157 = scmp.eq.s32.totalorder %s30, 1
      %p158 = por %p156, %p157
      %p160 = scmp.ne.s32.totalorder %s145, %s159
      %p161 = scmp.eq.s32.totalorder %s30, 0
      %p162 = por %p160, %p161
      %s164 = sadd.s32 %s163, 1
      %p167 = scmp.eq.s32.totalorder %s24, 1
      %p168 = scmp.ne.s32.totalorder %s163, %s165
      %p169 = scmp.eq.s32.totalorder %s24, 0
      %p170 = por %p168, %p169
      %p171 = scmp.ne.s32.totalorder %s163, %s165
      %p172 = scmp.eq.s32.totalorder %s29, 1
      %p173 = por %p171, %p172
      %p174 = scmp.ne.s32.totalorder %s165, %s166
      %p175 = scmp.eq.s32.totalorder %s29, 0
      %p176 = por %p174, %p175
      %p177 = scmp.ne.s32.totalorder %s165, %s166
      %p178 = scmp.eq.s32.totalorder %s30, 1
      %p179 = por %p177, %p178
      %p181 = scmp.ne.s32.totalorder %s166, %s180
      %p182 = scmp.eq.s32.totalorder %s30, 0
      %p183 = por %p181, %p182
      %s185 = sadd.s32 %s184, 1
      %p188 = scmp.eq.s32.totalorder %s24, 1
      %p189 = scmp.ne.s32.totalorder %s184, %s186
      %p190 = scmp.eq.s32.totalorder %s24, 0
      %p191 = por %p189, %p190
      %p192 = scmp.ne.s32.totalorder %s184, %s186
      %p193 = scmp.eq.s32.totalorder %s29, 1
      %p194 = por %p192, %p193
      %p195 = scmp.ne.s32.totalorder %s186, %s187
      %p196 = scmp.eq.s32.totalorder %s29, 0
      %p197 = por %p195, %p196
      %p198 = scmp.ne.s32.totalorder %s186, %s187
      %p199 = scmp.eq.s32.totalorder %s30, 1
      %p200 = por %p198, %p199
      %p202 = scmp.ne.s32.totalorder %s187, %s201
      %p203 = scmp.eq.s32.totalorder %s30, 0
      %p204 = por %p202, %p203
      %s206 = sadd.s32 %s205, 1
      %p209 = scmp.eq.s32.totalorder %s24, 1
      %p210 = scmp.ne.s32.totalorder %s205, %s207
      %p211 = scmp.eq.s32.totalorder %s24, 0
      %p212 = por %p210, %p211
      %p213 = scmp.ne.s32.totalorder %s205, %s207
      %p214 = scmp.eq.s32.totalorder %s29, 1
      %p215 = por %p213, %p214
      %p216 = scmp.ne.s32.totalorder %s207, %s208
      %p217 = scmp.eq.s32.totalorder %s29, 0
      %p218 = por %p216, %p217
      %p219 = scmp.ne.s32.totalorder %s207, %s208
      %p220 = scmp.eq.s32.totalorder %s30, 1
      %p221 = por %p219, %p220
      %p223 = scmp.ne.s32.totalorder %s208, %s222
      %p224 = scmp.eq.s32.totalorder %s30, 0
      %p225 = por %p223, %p224
      %s226 = ssub.s32 %s24, %s31
      %p227 = scmp.eq.s32.totalorder %s226, 0
      %s229 = sadd.s32 %s228, 1
      %s230 = scalar_select %p227, %s228, %s229
      %p233 = pneg %p227
      %p234 = scmp.eq.s32.totalorder %s24, 1
      %p235 = por %p233, %p234
      %p236 = scmp.ne.s32.totalorder %s228, %s231
      %p237 = scmp.eq.s32.totalorder %s24, 0
      %p238 = por %p236, %p237
      %p239 = scmp.ne.s32.totalorder %s228, %s231
      %p240 = scmp.eq.s32.totalorder %s29, 1
      %p241 = por %p239, %p240
      %p242 = scmp.ne.s32.totalorder %s231, %s232
      %p243 = scmp.eq.s32.totalorder %s29, 0
      %p244 = por %p242, %p243
      %p245 = scmp.ne.s32.totalorder %s231, %s232
      %p246 = scmp.eq.s32.totalorder %s30, 1
      %p247 = por %p245, %p246
      %p249 = scmp.ne.s32.totalorder %s232, %s248
      %p250 = scmp.eq.s32.totalorder %s30, 0
      %p251 = por %p249, %p250
      %p252 = scmp.le.s32.totalorder 1, %s24
      %p253 = scmp.lt.s32.totalorder %s24, 3
      %p254 = pnand %p252, %p253
      %p255 = pneg %p254
      // Predicated region
      $region9: #{tpu_custom_call.1} parent=5 // pred_check
        _
      $region10: #{tpu_custom_call.1} parent=5 // pred_check_branch
        %257 = sbr.rel (%p254) target = $region12
      $region11: #{tpu_custom_call.1} parent=5 // pred_region
        %s258 = ssub.s32 %s24, 1
        // Predicated region
        $region13: #{tpu_custom_call.1} parent=11 // pred_check
          %p259 = pneg %p71
        $region14: #{tpu_custom_call.1} parent=11 // pred_check_branch
          %261 = sbr.rel (%p259) target = $region16
        $region15: #{tpu_custom_call.1} parent=11 // pred_region
          %s263 = ssub.s32 256, 256
          %264 = vsyncadd [#allocation10], %s263
          %s265 = sshll.u32 [#allocation9], 4
          %s266 = int_to_ptr.vmem [resolvable:$true] %s265
          %271 = dma.hbm_to_vmem [thread:$0]  %s1, 256, %s266, [#allocation10], 128, 128, 8
        $region16: #{tpu_custom_call.1} parent=11 // pred_fallthru
          _
        // Predicated region
        $region17: #{tpu_custom_call.1} parent=11 // pred_check
          %p272 = pneg %p92
        $region18: #{tpu_custom_call.1} parent=11 // pred_check_branch
          %274 = sbr.rel (%p272) target = $region20
        $region19: #{tpu_custom_call.1} parent=11 // pred_region
          %s276 = ssub.s32 256, 256
          %277 = vsyncadd [#allocation10], %s276
          %s278 = sshll.u32 [#allocation11], 4
          %s279 = int_to_ptr.vmem [resolvable:$true] %s278
          %284 = dma.hbm_to_vmem [thread:$0]  %s2, 256, %s279, [#allocation10], 128, 128, 8
        $region20: #{tpu_custom_call.1} parent=11 // pred_fallthru
          _
        // Predicated region
        $region21: #{tpu_custom_call.1} parent=11 // pred_check
          %p285 = pneg %p113
        $region22: #{tpu_custom_call.1} parent=11 // pred_check_branch
          %287 = sbr.rel (%p285) target = $region24
        $region23: #{tpu_custom_call.1} parent=11 // pred_region
          %s289 = ssub.s32 1024, 1024
          %290 = vsyncadd [#allocation13], %s289
          %s291 = sshll.u32 [#allocation12], 4
          %s292 = int_to_ptr.vmem [resolvable:$true] %s291
          %297 = dma.hbm_to_vmem [thread:$0]  %s3, 1024, %s292, [#allocation13], 128, 128, 8
        $region24: #{tpu_custom_call.1} parent=11 // pred_fallthru
          _
        // Predicated region
        $region25: #{tpu_custom_call.1} parent=11 // pred_check
          %p298 = pneg %p134
        $region26: #{tpu_custom_call.1} parent=11 // pred_check_branch
          %300 = sbr.rel (%p298) target = $region28
        $region27: #{tpu_custom_call.1} parent=11 // pred_region
          %s302 = ssub.s32 256, 256
          %303 = vsyncadd [#allocation13], %s302
          %s304 = sshll.u32 [#allocation14], 4
          %s305 = int_to_ptr.vmem [resolvable:$true] %s304
          %310 = dma.hbm_to_vmem [thread:$0]  %s4, 256, %s305, [#allocation13], 64, 64, 4
        $region28: #{tpu_custom_call.1} parent=11 // pred_fallthru
          _
        // Predicated region
        $region29: #{tpu_custom_call.1} parent=11 // pred_check
          %p311 = pneg %p155
        $region30: #{tpu_custom_call.1} parent=11 // pred_check_branch
          %313 = sbr.rel (%p311) target = $region32
        $region31: #{tpu_custom_call.1} parent=11 // pred_region
          _
        $region32: #{tpu_custom_call.1} parent=11 // pred_fallthru
          _
        // Predicated region
        $region33: #{tpu_custom_call.1} parent=11 // pred_check
          %p314 = pneg %p176
        $region34: #{tpu_custom_call.1} parent=11 // pred_check_branch
          %316 = sbr.rel (%p314) target = $region36
        $region35: #{tpu_custom_call.1} parent=11 // pred_region
          %s318 = ssub.s32 256, 256
          %319 = vsyncadd [#allocation16], %s318
          %s320 = sshll.u32 [#allocation15], 4
          %s321 = int_to_ptr.vmem [resolvable:$true] %s320
          %326 = dma.hbm_to_vmem [thread:$0]  %s6, 256, %s321, [#allocation16], 64, 64, 4
        $region36: #{tpu_custom_call.1} parent=11 // pred_fallthru
          _
        // Predicated region
        $region37: #{tpu_custom_call.1} parent=11 // pred_check
          %p327 = pneg %p197
        $region38: #{tpu_custom_call.1} parent=11 // pred_check_branch
          %329 = sbr.rel (%p327) target = $region40
        $region39: #{tpu_custom_call.1} parent=11 // pred_region
          %s331 = ssub.s32 256, 256
          %332 = vsyncadd [#allocation16], %s331
          %s333 = sshll.u32 [#allocation17], 4
          %s334 = int_to_ptr.vmem [resolvable:$true] %s333
          %339 = dma.hbm_to_vmem [thread:$0]  %s7, 256, %s334, [#allocation16], 64, 64, 4
        $region40: #{tpu_custom_call.1} parent=11 // pred_fallthru
          _
        // Predicated region
        $region41: #{tpu_custom_call.1} parent=11 // pred_check
          %p340 = pneg %p218
        $region42: #{tpu_custom_call.1} parent=11 // pred_check_branch
          %342 = sbr.rel (%p340) target = $region44
        $region43: #{tpu_custom_call.1} parent=11 // pred_region
          _
        $region44: #{tpu_custom_call.1} parent=11 // pred_fallthru
          _
      $region12: #{tpu_custom_call.1} parent=5 // pred_fallthru
        _
      %p343 = scmp.lt.s32.totalorder %s24, 2
      // Predicated region
      $region45: #{tpu_custom_call.1} parent=5 // pred_check
        %p344 = pneg %p343
      $region46: #{tpu_custom_call.1} parent=5 // pred_check_branch
        %346 = sbr.rel (%p344) target = $region48
      $region47: #{tpu_custom_call.1} parent=5 // pred_region
        // Predicated region
        $region49: #{tpu_custom_call.1} parent=47 // pred_check
          %p347 = pneg %p44
        $region50: #{tpu_custom_call.1} parent=47 // pred_check_branch
          %349 = sbr.rel (%p347) target = $region52
        $region51: #{tpu_custom_call.1} parent=47 // pred_region
          %s350 = sand.u32 %s34, 1
          %s351 = scalar_lea.sflag [#allocation7], %s350
          %s352 = sand.u32 %s34, 1
          %s353 = smul.addr %s352, 16
          %s354 = scalar_lea.vmem [#allocation6], %s353
          %s356 = ssub.s32 256, 256
          %357 = vsyncadd %s351, %s356
          %s358 = smul.addr %s24, 2
          %s359 = smul.addr %s358, 128
          %s360 = scalar_lea.hbm %s0, %s359
          %s361 = sshll.u32 %s354, 4
          %s362 = int_to_ptr.vmem [resolvable:$true] %s361
          %367 = dma.hbm_to_vmem [thread:$0]  %s360, 256, %s362, %s351, 128, 128, 8
        $region52: #{tpu_custom_call.1} parent=47 // pred_fallthru
          _
      $region48: #{tpu_custom_call.1} parent=5 // pred_fallthru
        _
      %p368 = scmp.le.s32.totalorder 1, %s24
      %p369 = scmp.lt.s32.totalorder %s24, 3
      %p370 = pnand %p368, %p369
      %p371 = pneg %p370
      // Predicated region
      $region53: #{tpu_custom_call.1} parent=5 // pred_check
        _
      $region54: #{tpu_custom_call.1} parent=5 // pred_check_branch
        %373 = sbr.rel (%p370) target = $region56
      $region55: #{tpu_custom_call.1} parent=5 // pred_region
        %s374 = ssub.s32 %s24, 1
        %s375 = sand.u32 %s37, 1
        %s376 = scalar_lea.sflag [#allocation7], %s375
        %s377 = sand.u32 %s37, 1
        %s378 = smul.addr %s377, 16
        %s379 = scalar_lea.vmem [#allocation6], %s378
        // Predicated region
        $region57: #{tpu_custom_call.1} parent=55 // pred_check
          %p380 = pneg %p50
        $region58: #{tpu_custom_call.1} parent=55 // pred_check_branch
          %382 = sbr.rel (%p380) target = $region60
        $region59: #{tpu_custom_call.1} parent=55 // pred_region
          %383 = dma.done %s376, 256
        $region60: #{tpu_custom_call.1} parent=55 // pred_fallthru
          _
        // Predicated region
        $region61: #{tpu_custom_call.1} parent=55 // pred_check
          %p384 = pneg %p71
        $region62: #{tpu_custom_call.1} parent=55 // pred_check_branch
          %386 = sbr.rel (%p384) target = $region64
        $region63: #{tpu_custom_call.1} parent=55 // pred_region
          %387 = dma.done [#allocation10], 256
        $region64: #{tpu_custom_call.1} parent=55 // pred_fallthru
          _
        // Predicated region
        $region65: #{tpu_custom_call.1} parent=55 // pred_check
          %p388 = pneg %p92
        $region66: #{tpu_custom_call.1} parent=55 // pred_check_branch
          %390 = sbr.rel (%p388) target = $region68
        $region67: #{tpu_custom_call.1} parent=55 // pred_region
          %391 = dma.done [#allocation10], 256
        $region68: #{tpu_custom_call.1} parent=55 // pred_fallthru
          _
        // Predicated region
        $region69: #{tpu_custom_call.1} parent=55 // pred_check
          %p392 = pneg %p113
        $region70: #{tpu_custom_call.1} parent=55 // pred_check_branch
          %394 = sbr.rel (%p392) target = $region72
        $region71: #{tpu_custom_call.1} parent=55 // pred_region
          %395 = dma.done [#allocation13], 1024
        $region72: #{tpu_custom_call.1} parent=55 // pred_fallthru
          _
        // Predicated region
        $region73: #{tpu_custom_call.1} parent=55 // pred_check
          %p396 = pneg %p134
        $region74: #{tpu_custom_call.1} parent=55 // pred_check_branch
          %398 = sbr.rel (%p396) target = $region76
        $region75: #{tpu_custom_call.1} parent=55 // pred_region
          %399 = dma.done [#allocation13], 256
        $region76: #{tpu_custom_call.1} parent=55 // pred_fallthru
          _
        // Predicated region
        $region77: #{tpu_custom_call.1} parent=55 // pred_check
          %p400 = pneg %p176
        $region78: #{tpu_custom_call.1} parent=55 // pred_check_branch
          %402 = sbr.rel (%p400) target = $region80
        $region79: #{tpu_custom_call.1} parent=55 // pred_region
          %403 = dma.done [#allocation16], 256
        $region80: #{tpu_custom_call.1} parent=55 // pred_fallthru
          _
        // Predicated region
        $region81: #{tpu_custom_call.1} parent=55 // pred_check
          %p404 = pneg %p197
        $region82: #{tpu_custom_call.1} parent=55 // pred_check_branch
          %406 = sbr.rel (%p404) target = $region84
        $region83: #{tpu_custom_call.1} parent=55 // pred_region
          %407 = dma.done [#allocation16], 256
        $region84: #{tpu_custom_call.1} parent=55 // pred_fallthru
          _
        %s408 = sand.u32 %s37, 1
        %s409 = scalar_lea.sflag [#allocation7], %s408
        %s410 = sand.u32 %s37, 1
        %s411 = smul.addr %s410, 16
        %s412 = scalar_lea.vmem [#allocation6], %s411
        %p413 = pneg %p50
        %p414 = pneg %p47
        %p415 = pneg %p71
        %p416 = pneg %p68
        %p417 = pneg %p92
        %p418 = pneg %p89
        %p419 = pneg %p113
        %p420 = pneg %p110
        %p421 = pneg %p134
        %p422 = pneg %p131
        %p423 = pneg %p155
        %p424 = pneg %p152
        %p425 = pneg %p176
        %p426 = pneg %p173
        %p427 = pneg %p197
        %p428 = pneg %p194
        %p429 = pneg %p218
        %p430 = pneg %p215
        %p431 = pneg %p244
        %p432 = pneg %p241
        %s433 = sand.u32 %s231, 1
        %s434 = scalar_lea.sflag [#allocation8], %s433
        %s435 = sand.u32 %s231, 1
        %s436 = smul.addr %s435, 16
        %s437 = scalar_lea.vmem [#allocation18], %s436
        %v439 = vld [vmem:[%s379] sm:$0xff]
        %v440 = vld [vmem:[%s379 + $0x8] sm:$0xff]
        %v441 = vld [vmem:[#allocation9] sm:$0xff]
        %v442 = vld [vmem:[#allocation9 + $0x8] sm:$0xff]
        %v443 = vadd.f32 %v439, %v441
        %v444 = vadd.f32 %v440, %v442
        %v445 = vpack.c.bf16 %v444, %v443
        %v446 = vld [vmem:[#allocation11] sm:$0xff]
        %v447 = vld [vmem:[#allocation11 + $0x8] sm:$0xff]
        %v448 = vadd.f32 %v439, %v446
        %v449 = vadd.f32 %v440, %v447
        %v450 = vpack.c.bf16 %v449, %v448
        %v451 = vpack.c.bf16 %v440, %v439
        %v452 = vld [vmem:[#allocation14] sm:$0xf]
        %v453 = vld [vmem:[#allocation14 + $0x4] sm:$0xf]
        %v454 = vld [vmem:[#allocation14 + $0x8] sm:$0xf]
        %v455 = vld [vmem:[#allocation14 + $0xc] sm:$0xf]
        %v460 = vunpack.c.l.b16 %v452
        %v461 = vunpack.c.l.b16 %v453
        %v462 = vunpack.c.l.b16 %v454
        %v463 = vunpack.c.l.b16 %v455
        %v464 = vpack.c.b16 %v461, %v460
        %v465 = vpack.c.b16 %v463, %v462
        %vm468 = vcmask 261120
        %v470 = vsel %vm468, %v445, 0
        %472 = vmatprep.subr.bf16.mxu0 0
        %473 = vmatpush1.bf16.msra.mxu0 %v464
        %474 = vmatprep.subr.bf16.mxu0 0
        %475 = vmatpush1.bf16.msra.mxu0 %v465
        %476 = vmatprep.subr.bf16.mxu0 0
        %477 = vmatpush1.bf16.msra.mxu0 0
        %478 = vmatprep.subr.bf16.mxu0 0
        %479 = vmatpush1.bf16.msra.mxu0 0
        %480 = vmatprep.subr.bf16.mxu0 0
        %481 = vmatpush1.bf16.msra.mxu0 0
        %482 = vmatprep.subr.bf16.mxu0 0
        %483 = vmatpush1.bf16.msra.mxu0 0
        %484 = vmatprep.subr.bf16.mxu0 0
        %485 = vmatpush1.bf16.msra.mxu0 0
        %486 = vmatprep.subr.bf16.mxu0 0
        %487 = vmatpush1.bf16.msra.mxu0 0
        %488 = vmatprep.subr.bf16.mxu0 0
        %489 = vmatpush1.bf16.msra.mxu0 0
        %490 = vmatprep.subr.bf16.mxu0 0
        %491 = vmatpush1.bf16.msra.mxu0 0
        %492 = vmatprep.subr.bf16.mxu0 0
        %493 = vmatpush1.bf16.msra.mxu0 0
        %494 = vmatprep.subr.bf16.mxu0 0
        %495 = vmatpush1.bf16.msra.mxu0 0
        %496 = vmatprep.subr.bf16.mxu0 0
        %497 = vmatpush1.bf16.msra.mxu0 0
        %498 = vmatprep.subr.bf16.mxu0 0
        %499 = vmatpush1.bf16.msra.mxu0 0
        %500 = vmatprep.subr.bf16.mxu0 0
        %501 = vmatpush1.bf16.msra.mxu0 0
        %502 = vmatprep.subr.bf16.mxu0 0
        %503 = vmatpush1.bf16.msra.mxu0 0
        %504 = vmatprep.mubr.bf16.mxu0 0
        %505 = vmatmul.mubr.bf16.gmra.mrb[0].mxu0 %v470
        %v506 = vpop.f32.mrb[0].mxu0
        %v507 = vadd.f32 0.0, %v506
        %v508 = vpop.f32.mrb[0].mxu0
        %v509 = vpop.f32.mrb[0].mxu0
        %v510 = vadd.f32 0.0, %v509
        %v511 = vpop.f32.mrb[0].mxu0
        %512 = vdwg.mxu0
        %v513 = vpack.c.bf16 %v510, %v507
        %514 = vst.msk [vmem:[#allocation2] sm:$0xff] %vm468, %v513
        %v515 = vld [vmem:[%s5] sm:$0xf]
        %v516 = vld [vmem:[%s5 + $0x4] sm:$0xf]
        %v517 = vld [vmem:[%s5 + $0x8] sm:$0xf]
        %v518 = vld [vmem:[%s5 + $0xc] sm:$0xf]
        %v523 = vunpack.c.l.b16 %v515
        %v524 = vunpack.c.l.b16 %v516
        %v525 = vunpack.c.l.b16 %v517
        %v526 = vunpack.c.l.b16 %v518
        %v527 = vpack.c.b16 %v524, %v523
        %v528 = vpack.c.b16 %v526, %v525
        %v532 = vsel %vm468, %v450, 0
        %534 = vmatprep.subr.bf16.mxu0 0
        %535 = vmatpush1.bf16.msra.mxu0 %v527
        %536 = vmatprep.subr.bf16.mxu0 0
        %537 = vmatpush1.bf16.msra.mxu0 %v528
        %538 = vmatprep.subr.bf16.mxu0 0
        %539 = vmatpush1.bf16.msra.mxu0 0
        %540 = vmatprep.subr.bf16.mxu0 0
        %541 = vmatpush1.bf16.msra.mxu0 0
        %542 = vmatprep.subr.bf16.mxu0 0
        %543 = vmatpush1.bf16.msra.mxu0 0
        %544 = vmatprep.subr.bf16.mxu0 0
        %545 = vmatpush1.bf16.msra.mxu0 0
        %546 = vmatprep.subr.bf16.mxu0 0
        %547 = vmatpush1.bf16.msra.mxu0 0
        %548 = vmatprep.subr.bf16.mxu0 0
        %549 = vmatpush1.bf16.msra.mxu0 0
        %550 = vmatprep.subr.bf16.mxu0 0
        %551 = vmatpush1.bf16.msra.mxu0 0
        %552 = vmatprep.subr.bf16.mxu0 0
        %553 = vmatpush1.bf16.msra.mxu0 0
        %554 = vmatprep.subr.bf16.mxu0 0
        %555 = vmatpush1.bf16.msra.mxu0 0
        %556 = vmatprep.subr.bf16.mxu0 0
        %557 = vmatpush1.bf16.msra.mxu0 0
        %558 = vmatprep.subr.bf16.mxu0 0
        %559 = vmatpush1.bf16.msra.mxu0 0
        %560 = vmatprep.subr.bf16.mxu0 0
        %561 = vmatpush1.bf16.msra.mxu0 0
        %562 = vmatprep.subr.bf16.mxu0 0
        %563 = vmatpush1.bf16.msra.mxu0 0
        %564 = vmatprep.subr.bf16.mxu0 0
        %565 = vmatpush1.bf16.msra.mxu0 0
        %566 = vmatprep.mubr.bf16.mxu0 0
        %567 = vmatmul.mubr.bf16.gmra.mrb[0].mxu0 %v532
        %v568 = vpop.f32.mrb[0].mxu0
        %v569 = vadd.f32 0.0, %v568
        %v570 = vpop.f32.mrb[0].mxu0
        %v571 = vpop.f32.mrb[0].mxu0
        %v572 = vadd.f32 0.0, %v571
        %v573 = vpop.f32.mrb[0].mxu0
        %574 = vdwg.mxu0
        %v575 = vpack.c.bf16 %v572, %v569
        %576 = vst.msk [vmem:[#allocation3] sm:$0xff] %vm468, %v575
        %v577 = vld [vmem:[#allocation15] sm:$0xf]
        %v578 = vld [vmem:[#allocation15 + $0x4] sm:$0xf]
        %v579 = vld [vmem:[#allocation15 + $0x8] sm:$0xf]
        %v580 = vld [vmem:[#allocation15 + $0xc] sm:$0xf]
        %v585 = vunpack.c.l.b16 %v577
        %v586 = vunpack.c.l.b16 %v578
        %v587 = vunpack.c.l.b16 %v579
        %v588 = vunpack.c.l.b16 %v580
        %v589 = vpack.c.b16 %v586, %v585
        %v590 = vpack.c.b16 %v588, %v587
        %v594 = vsel %vm468, %v451, 0
        %596 = vmatprep.subr.bf16.mxu0 0
        %597 = vmatpush1.bf16.msra.mxu0 %v589
        %598 = vmatprep.subr.bf16.mxu0 0
        %599 = vmatpush1.bf16.msra.mxu0 %v590
        %600 = vmatprep.subr.bf16.mxu0 0
        %601 = vmatpush1.bf16.msra.mxu0 0
        %602 = vmatprep.subr.bf16.mxu0 0
        %603 = vmatpush1.bf16.msra.mxu0 0
        %604 = vmatprep.subr.bf16.mxu0 0
        %605 = vmatpush1.bf16.msra.mxu0 0
        %606 = vmatprep.subr.bf16.mxu0 0
        %607 = vmatpush1.bf16.msra.mxu0 0
        %608 = vmatprep.subr.bf16.mxu0 0
        %609 = vmatpush1.bf16.msra.mxu0 0
        %610 = vmatprep.subr.bf16.mxu0 0
        %611 = vmatpush1.bf16.msra.mxu0 0
        %612 = vmatprep.subr.bf16.mxu0 0
        %613 = vmatpush1.bf16.msra.mxu0 0
        %614 = vmatprep.subr.bf16.mxu0 0
        %615 = vmatpush1.bf16.msra.mxu0 0
        %616 = vmatprep.subr.bf16.mxu0 0
        %617 = vmatpush1.bf16.msra.mxu0 0
        %618 = vmatprep.subr.bf16.mxu0 0
        %619 = vmatpush1.bf16.msra.mxu0 0
        %620 = vmatprep.subr.bf16.mxu0 0
        %621 = vmatpush1.bf16.msra.mxu0 0
        %622 = vmatprep.subr.bf16.mxu0 0
        %623 = vmatpush1.bf16.msra.mxu0 0
        %624 = vmatprep.subr.bf16.mxu0 0
        %625 = vmatpush1.bf16.msra.mxu0 0
        %626 = vmatprep.subr.bf16.mxu0 0
        %627 = vmatpush1.bf16.msra.mxu0 0
        %628 = vmatprep.mubr.bf16.mxu0 0
        %629 = vmatmul.mubr.bf16.gmra.mrb[0].mxu0 %v594
        %v630 = vpop.f32.mrb[0].mxu0
        %v631 = vadd.f32 0.0, %v630
        %v632 = vpop.f32.mrb[0].mxu0
        %v633 = vpop.f32.mrb[0].mxu0
        %v634 = vadd.f32 0.0, %v633
        %v635 = vpop.f32.mrb[0].mxu0
        %636 = vdwg.mxu0
        %v637 = vpack.c.bf16 %v634, %v631
        %638 = vst.msk [vmem:[#allocation4] sm:$0xff] %vm468, %v637
        %v639 = vld [vmem:[#allocation2] sm:$0xff]
        %v640 = vld [vmem:[#allocation3] sm:$0xff]
        %v641 = vld [vmem:[#allocation4] sm:$0xff]
        %v642 = vld [vmem:[#allocation12] sm:$0xff]
        %v643 = vld [vmem:[#allocation12 + $0x8] sm:$0xff]
        %vm644 = vcmask 64512
        %v646 = vsel %vm644, %v639, 0
        %v649 = vsel %vm644, %v640, 0
        %651 = vmatprep.subr.bf16.mxu0 0
        %652 = vmatpush1.bf16.xpose.msra.mxu0 %v649
        %653 = vmatprep.subr.bf16.mxu0 0
        %654 = vmatpush1.bf16.xpose.msra.mxu0 0
        %655 = vmatprep.subr.bf16.mxu0 0
        %656 = vmatpush1.bf16.xpose.msra.mxu0 0
        %657 = vmatprep.subr.bf16.mxu0 0
        %658 = vmatpush1.bf16.xpose.msra.mxu0 0
        %659 = vmatprep.subr.bf16.mxu0 0
        %660 = vmatpush1.bf16.xpose.msra.mxu0 0
        %661 = vmatprep.subr.bf16.mxu0 0
        %662 = vmatpush1.bf16.xpose.msra.mxu0 0
        %663 = vmatprep.subr.bf16.mxu0 0
        %664 = vmatpush1.bf16.xpose.msra.mxu0 0
        %665 = vmatprep.subr.bf16.mxu0 0
        %666 = vmatpush1.bf16.xpose.msra.mxu0 0
        %667 = vmatprep.subr.bf16.mxu0 0
        %668 = vmatpush1.bf16.xpose.msra.mxu0 0
        %669 = vmatprep.subr.bf16.mxu0 0
        %670 = vmatpush1.bf16.xpose.msra.mxu0 0
        %671 = vmatprep.subr.bf16.mxu0 0
        %672 = vmatpush1.bf16.xpose.msra.mxu0 0
        %673 = vmatprep.subr.bf16.mxu0 0
        %674 = vmatpush1.bf16.xpose.msra.mxu0 0
        %675 = vmatprep.subr.bf16.mxu0 0
        %676 = vmatpush1.bf16.xpose.msra.mxu0 0
        %677 = vmatprep.subr.bf16.mxu0 0
        %678 = vmatpush1.bf16.xpose.msra.mxu0 0
        %679 = vmatprep.subr.bf16.mxu0 0
        %680 = vmatpush1.bf16.xpose.msra.mxu0 0
        %681 = vmatprep.subr.bf16.mxu0 0
        %682 = vmatpush1.bf16.xpose.msra.mxu0 0
        %683 = vmatprep.mubr.bf16.mxu0 0
        %684 = vmatmul.mubr.bf16.gmra.mrb[0].mxu0 %v646
        %v685 = vpop.f32.mrb[0].mxu0
        %v686 = vadd.f32 %v642, %v685
        %v687 = vpop.f32.mrb[0].mxu0
        %v688 = vpop.f32.mrb[0].mxu0
        %v689 = vadd.f32 %v643, %v688
        %v690 = vpop.f32.mrb[0].mxu0
        %691 = vdwg.mxu0
        %vm692 = vcmask 130048
        %v693 = vsel %vm692, %v686, -inf
        %694 = vmax.xlane.f32.xlu0 %v693
        %v695 = vpop.xlane.xlu0 %694
        %v696 = vsel %vm692, %v689, -inf
        %697 = vmax.xlane.f32.xlu0 %v696
        %v698 = vpop.xlane.xlu0 %697
        %v699 = vsub.f32 %v686, %v695
        %v700 = vsub.f32 %v689, %v698
        %v701 = vmul.f32 %v699, 1.442695
        %v702 = vpow.pop %v701
        %v703 = vmul.f32 %v700, 1.442695
        %v704 = vpow.pop %v703
        %v705 = vsel %vm692, %v702, 0.0
        %706 = vadd.xlane.f32.xlu0 %v705
        %v707 = vpop.xlane.xlu0 %706
        %v708 = vsel %vm692, %v704, 0.0
        %709 = vadd.xlane.f32.xlu0 %v708
        %v710 = vpop.xlane.xlu0 %709
        %v711 = vrcp.pop %v707
        %v712 = vmul.f32 %v702, %v711
        %v713 = vrcp.pop %v710
        %v714 = vmul.f32 %v704, %v713
        %v715 = vpack.c.bf16 %v714, %v712
        %v717 = vsel %vm692, %v715, 0
        %719 = vmatprep.subr.bf16.mxu0 0
        %720 = vmatpush1.bf16.msra.mxu0 %v641
        %721 = vmatprep.subr.bf16.mxu0 0
        %722 = vmatpush1.bf16.msra.mxu0 0
        %723 = vmatprep.subr.bf16.mxu0 0
        %724 = vmatpush1.bf16.msra.mxu0 0
        %725 = vmatprep.subr.bf16.mxu0 0
        %726 = vmatpush1.bf16.msra.mxu0 0
        %727 = vmatprep.subr.bf16.mxu0 0
        %728 = vmatpush1.bf16.msra.mxu0 0
        %729 = vmatprep.subr.bf16.mxu0 0
        %730 = vmatpush1.bf16.msra.mxu0 0
        %731 = vmatprep.subr.bf16.mxu0 0
        %732 = vmatpush1.bf16.msra.mxu0 0
        %733 = vmatprep.subr.bf16.mxu0 0
        %734 = vmatpush1.bf16.msra.mxu0 0
        %735 = vmatprep.subr.bf16.mxu0 0
        %736 = vmatpush1.bf16.msra.mxu0 0
        %737 = vmatprep.subr.bf16.mxu0 0
        %738 = vmatpush1.bf16.msra.mxu0 0
        %739 = vmatprep.subr.bf16.mxu0 0
        %740 = vmatpush1.bf16.msra.mxu0 0
        %741 = vmatprep.subr.bf16.mxu0 0
        %742 = vmatpush1.bf16.msra.mxu0 0
        %743 = vmatprep.subr.bf16.mxu0 0
        %744 = vmatpush1.bf16.msra.mxu0 0
        %745 = vmatprep.subr.bf16.mxu0 0
        %746 = vmatpush1.bf16.msra.mxu0 0
        %747 = vmatprep.subr.bf16.mxu0 0
        %748 = vmatpush1.bf16.msra.mxu0 0
        %749 = vmatprep.subr.bf16.mxu0 0
        %750 = vmatpush1.bf16.msra.mxu0 0
        %751 = vmatprep.mubr.bf16.mxu0 0
        %752 = vmatmul.mubr.bf16.gmra.mrb[0].mxu0 %v717
        %v753 = vpop.f32.mrb[0].mxu0
        %v754 = vadd.f32 0.0, %v753
        %v755 = vpop.f32.mrb[0].mxu0
        %v756 = vpop.f32.mrb[0].mxu0
        %v757 = vadd.f32 0.0, %v756
        %v758 = vpop.f32.mrb[0].mxu0
        %759 = vdwg.mxu0
        %v760 = vpack.c.bf16 %v757, %v754
        %761 = vst.msk [vmem:[#allocation5] sm:$0xff] %vm644, %v760
        %v762 = vld [vmem:[#allocation2] sm:$0xff]
        %v763 = vld [vmem:[#allocation3] sm:$0xff]
        %v764 = vld [vmem:[#allocation4] sm:$0xff]
        %s765 = scalar_lea.vmem [#allocation12], 16
        %v766 = vld [vmem:[%s765] sm:$0xff]
        %v767 = vld [vmem:[%s765 + $0x8] sm:$0xff]
        %769 = vrot.lane.b32.xlu0 %v762, 120
        %v770 = vpop.permute.xlu0 %769
        %772 = vrot.lane.b32.xlu0 %v763, 120
        %v773 = vpop.permute.xlu0 %772
        %v775 = vsel %vm644, %v770, 0
        %v778 = vsel %vm644, %v773, 0
        %780 = vmatprep.subr.bf16.mxu0 0
        %781 = vmatpush1.bf16.xpose.msra.mxu0 %v778
        %782 = vmatprep.subr.bf16.mxu0 0
        %783 = vmatpush1.bf16.xpose.msra.mxu0 0
        %784 = vmatprep.subr.bf16.mxu0 0
        %785 = vmatpush1.bf16.xpose.msra.mxu0 0
        %786 = vmatprep.subr.bf16.mxu0 0
        %787 = vmatpush1.bf16.xpose.msra.mxu0 0
        %788 = vmatprep.subr.bf16.mxu0 0
        %789 = vmatpush1.bf16.xpose.msra.mxu0 0
        %790 = vmatprep.subr.bf16.mxu0 0
        %791 = vmatpush1.bf16.xpose.msra.mxu0 0
        %792 = vmatprep.subr.bf16.mxu0 0
        %793 = vmatpush1.bf16.xpose.msra.mxu0 0
        %794 = vmatprep.subr.bf16.mxu0 0
        %795 = vmatpush1.bf16.xpose.msra.mxu0 0
        %796 = vmatprep.subr.bf16.mxu0 0
        %797 = vmatpush1.bf16.xpose.msra.mxu0 0
        %798 = vmatprep.subr.bf16.mxu0 0
        %799 = vmatpush1.bf16.xpose.msra.mxu0 0
        %800 = vmatprep.subr.bf16.mxu0 0
        %801 = vmatpush1.bf16.xpose.msra.mxu0 0
        %802 = vmatprep.subr.bf16.mxu0 0
        %803 = vmatpush1.bf16.xpose.msra.mxu0 0
        %804 = vmatprep.subr.bf16.mxu0 0
        %805 = vmatpush1.bf16.xpose.msra.mxu0 0
        %806 = vmatprep.subr.bf16.mxu0 0
        %807 = vmatpush1.bf16.xpose.msra.mxu0 0
        %808 = vmatprep.subr.bf16.mxu0 0
        %809 = vmatpush1.bf16.xpose.msra.mxu0 0
        %810 = vmatprep.subr.bf16.mxu0 0
        %811 = vmatpush1.bf16.xpose.msra.mxu0 0
        %812 = vmatprep.mubr.bf16.mxu0 0
        %813 = vmatmul.mubr.bf16.gmra.mrb[0].mxu0 %v775
        %v814 = vpop.f32.mrb[0].mxu0
        %v815 = vadd.f32 %v766, %v814
        %v816 = vpop.f32.mrb[0].mxu0
        %v817 = vpop.f32.mrb[0].mxu0
        %v818 = vadd.f32 %v767, %v817
        %v819 = vpop.f32.mrb[0].mxu0
        %820 = vdwg.mxu0
        %v821 = vsel %vm692, %v815, -inf
        %822 = vmax.xlane.f32.xlu0 %v821
        %v823 = vpop.xlane.xlu0 %822
        %v824 = vsel %vm692, %v818, -inf
        %825 = vmax.xlane.f32.xlu0 %v824
        %v826 = vpop.xlane.xlu0 %825
        %v827 = vsub.f32 %v815, %v823
        %v828 = vsub.f32 %v818, %v826
        %v829 = vmul.f32 %v827, 1.442695
        %v830 = vpow.pop %v829
        %v831 = vmul.f32 %v828, 1.442695
        %v832 = vpow.pop %v831
        %v833 = vsel %vm692, %v830, 0.0
        %834 = vadd.xlane.f32.xlu0 %v833
        %v835 = vpop.xlane.xlu0 %834
        %v836 = vsel %vm692, %v832, 0.0
        %837 = vadd.xlane.f32.xlu0 %v836
        %v838 = vpop.xlane.xlu0 %837
        %v839 = vrcp.pop %v835
        %v840 = vmul.f32 %v830, %v839
        %v841 = vrcp.pop %v838
        %v842 = vmul.f32 %v832, %v841
        %v843 = vpack.c.bf16 %v842, %v840
        %845 = vrot.lane.b32.xlu0 %v764, 120
        %v846 = vpop.permute.xlu0 %845
        %v849 = vsel %vm692, %v843, 0
        %851 = vmatprep.subr.bf16.mxu0 0
        %852 = vmatpush1.bf16.msra.mxu0 %v846
        %853 = vmatprep.subr.bf16.mxu0 0
        %854 = vmatpush1.bf16.msra.mxu0 0
        %855 = vmatprep.subr.bf16.mxu0 0
        %856 = vmatpush1.bf16.msra.mxu0 0
        %857 = vmatprep.subr.bf16.mxu0 0
        %858 = vmatpush1.bf16.msra.mxu0 0
        %859 = vmatprep.subr.bf16.mxu0 0
        %860 = vmatpush1.bf16.msra.mxu0 0
        %861 = vmatprep.subr.bf16.mxu0 0
        %862 = vmatpush1.bf16.msra.mxu0 0
        %863 = vmatprep.subr.bf16.mxu0 0
        %864 = vmatpush1.bf16.msra.mxu0 0
        %865 = vmatprep.subr.bf16.mxu0 0
        %866 = vmatpush1.bf16.msra.mxu0 0
        %867 = vmatprep.subr.bf16.mxu0 0
        %868 = vmatpush1.bf16.msra.mxu0 0
        %869 = vmatprep.subr.bf16.mxu0 0
        %870 = vmatpush1.bf16.msra.mxu0 0
        %871 = vmatprep.subr.bf16.mxu0 0
        %872 = vmatpush1.bf16.msra.mxu0 0
        %873 = vmatprep.subr.bf16.mxu0 0
        %874 = vmatpush1.bf16.msra.mxu0 0
        %875 = vmatprep.subr.bf16.mxu0 0
        %876 = vmatpush1.bf16.msra.mxu0 0
        %877 = vmatprep.subr.bf16.mxu0 0
        %878 = vmatpush1.bf16.msra.mxu0 0
        %879 = vmatprep.subr.bf16.mxu0 0
        %880 = vmatpush1.bf16.msra.mxu0 0
        %881 = vmatprep.subr.bf16.mxu0 0
        %882 = vmatpush1.bf16.msra.mxu0 0
        %883 = vmatprep.mubr.bf16.mxu0 0
        %884 = vmatmul.mubr.bf16.gmra.mrb[0].mxu0 %v849
        %v885 = vpop.f32.mrb[0].mxu0
        %v886 = vadd.f32 0.0, %v885
        %v887 = vpop.f32.mrb[0].mxu0
        %v888 = vpop.f32.mrb[0].mxu0
        %v889 = vadd.f32 0.0, %v888
        %v890 = vpop.f32.mrb[0].mxu0
        %891 = vdwg.mxu0
        %v892 = vpack.c.bf16 %v889, %v886
        %894 = vrot.lane.b32.xlu0 %v892, 8
        %v895 = vpop.permute.xlu0 %894
        %vm897 = vcmask 130112
        %898 = vst.msk [vmem:[#allocation5] sm:$0xff] %vm897, %v895
        %v899 = vld [vmem:[#allocation2] sm:$0xff]
        %v900 = vld [vmem:[#allocation3] sm:$0xff]
        %v901 = vld [vmem:[#allocation4] sm:$0xff]
        %s902 = scalar_lea.vmem [#allocation12], 32
        %v903 = vld [vmem:[%s902] sm:$0xff]
        %v904 = vld [vmem:[%s902 + $0x8] sm:$0xff]
        %906 = vrot.lane.b32.xlu0 %v899, 112
        %v907 = vpop.permute.xlu0 %906
        %909 = vrot.lane.b32.xlu0 %v900, 112
        %v910 = vpop.permute.xlu0 %909
        %v912 = vsel %vm644, %v907, 0
        %v915 = vsel %vm644, %v910, 0
        %917 = vmatprep.subr.bf16.mxu0 0
        %918 = vmatpush1.bf16.xpose.msra.mxu0 %v915
        %919 = vmatprep.subr.bf16.mxu0 0
        %920 = vmatpush1.bf16.xpose.msra.mxu0 0
        %921 = vmatprep.subr.bf16.mxu0 0
        %922 = vmatpush1.bf16.xpose.msra.mxu0 0
        %923 = vmatprep.subr.bf16.mxu0 0
        %924 = vmatpush1.bf16.xpose.msra.mxu0 0
        %925 = vmatprep.subr.bf16.mxu0 0
        %926 = vmatpush1.bf16.xpose.msra.mxu0 0
        %927 = vmatprep.subr.bf16.mxu0 0
        %928 = vmatpush1.bf16.xpose.msra.mxu0 0
        %929 = vmatprep.subr.bf16.mxu0 0
        %930 = vmatpush1.bf16.xpose.msra.mxu0 0
        %931 = vmatprep.subr.bf16.mxu0 0
        %932 = vmatpush1.bf16.xpose.msra.mxu0 0
        %933 = vmatprep.subr.bf16.mxu0 0
        %934 = vmatpush1.bf16.xpose.msra.mxu0 0
        %935 = vmatprep.subr.bf16.mxu0 0
        %936 = vmatpush1.bf16.xpose.msra.mxu0 0
        %937 = vmatprep.subr.bf16.mxu0 0
        %938 = vmatpush1.bf16.xpose.msra.mxu0 0
        %939 = vmatprep.subr.bf16.mxu0 0
        %940 = vmatpush1.bf16.xpose.msra.mxu0 0
        %941 = vmatprep.subr.bf16.mxu0 0
        %942 = vmatpush1.bf16.xpose.msra.mxu0 0
        %943 = vmatprep.subr.bf16.mxu0 0
        %944 = vmatpush1.bf16.xpose.msra.mxu0 0
        %945 = vmatprep.subr.bf16.mxu0 0
        %946 = vmatpush1.bf16.xpose.msra.mxu0 0
        %947 = vmatprep.subr.bf16.mxu0 0
        %948 = vmatpush1.bf16.xpose.msra.mxu0 0
        %949 = vmatprep.mubr.bf16.mxu0 0
        %950 = vmatmul.mubr.bf16.gmra.mrb[0].mxu0 %v912
        %v951 = vpop.f32.mrb[0].mxu0
        %v952 = vadd.f32 %v903, %v951
        %v953 = vpop.f32.mrb[0].mxu0
        %v954 = vpop.f32.mrb[0].mxu0
        %v955 = vadd.f32 %v904, %v954
        %v956 = vpop.f32.mrb[0].mxu0
        %957 = vdwg.mxu0
        %v958 = vsel %vm692, %v952, -inf
        %959 = vmax.xlane.f32.xlu0 %v958
        %v960 = vpop.xlane.xlu0 %959
        %v961 = vsel %vm692, %v955, -inf
        %962 = vmax.xlane.f32.xlu0 %v961
        %v963 = vpop.xlane.xlu0 %962
        %v964 = vsub.f32 %v952, %v960
        %v965 = vsub.f32 %v955, %v963
        %v966 = vmul.f32 %v964, 1.442695
        %v967 = vpow.pop %v966
        %v968 = vmul.f32 %v965, 1.442695
        %v969 = vpow.pop %v968
        %v970 = vsel %vm692, %v967, 0.0
        %971 = vadd.xlane.f32.xlu0 %v970
        %v972 = vpop.xlane.xlu0 %971
        %v973 = vsel %vm692, %v969, 0.0
        %974 = vadd.xlane.f32.xlu0 %v973
        %v975 = vpop.xlane.xlu0 %974
        %v976 = vrcp.pop %v972
        %v977 = vmul.f32 %v967, %v976
        %v978 = vrcp.pop %v975
        %v979 = vmul.f32 %v969, %v978
        %v980 = vpack.c.bf16 %v979, %v977
        %982 = vrot.lane.b32.xlu0 %v901, 112
        %v983 = vpop.permute.xlu0 %982
        %v986 = vsel %vm692, %v980, 0
        %988 = vmatprep.subr.bf16.mxu0 0
        %989 = vmatpush1.bf16.msra.mxu0 %v983
        %990 = vmatprep.subr.bf16.mxu0 0
        %991 = vmatpush1.bf16.msra.mxu0 0
        %992 = vmatprep.subr.bf16.mxu0 0
        %993 = vmatpush1.bf16.msra.mxu0 0
        %994 = vmatprep.subr.bf16.mxu0 0
        %995 = vmatpush1.bf16.msra.mxu0 0
        %996 = vmatprep.subr.bf16.mxu0 0
        %997 = vmatpush1.bf16.msra.mxu0 0
        %998 = vmatprep.subr.bf16.mxu0 0
        %999 = vmatpush1.bf16.msra.mxu0 0
        %1000 = vmatprep.subr.bf16.mxu0 0
        %1001 = vmatpush1.bf16.msra.mxu0 0
        %1002 = vmatprep.subr.bf16.mxu0 0
        %1003 = vmatpush1.bf16.msra.mxu0 0
        %1004 = vmatprep.subr.bf16.mxu0 0
        %1005 = vmatpush1.bf16.msra.mxu0 0
        %1006 = vmatprep.subr.bf16.mxu0 0
        %1007 = vmatpush1.bf16.msra.mxu0 0
        %1008 = vmatprep.subr.bf16.mxu0 0
        %1009 = vmatpush1.bf16.msra.mxu0 0
        %1010 = vmatprep.subr.bf16.mxu0 0
        %1011 = vmatpush1.bf16.msra.mxu0 0
        %1012 = vmatprep.subr.bf16.mxu0 0
        %1013 = vmatpush1.bf16.msra.mxu0 0
        %1014 = vmatprep.subr.bf16.mxu0 0
        %1015 = vmatpush1.bf16.msra.mxu0 0
        %1016 = vmatprep.subr.bf16.mxu0 0
        %1017 = vmatpush1.bf16.msra.mxu0 0
        %1018 = vmatprep.subr.bf16.mxu0 0
        %1019 = vmatpush1.bf16.msra.mxu0 0
        %1020 = vmatprep.mubr.bf16.mxu0 0
        %1021 = vmatmul.mubr.bf16.gmra.mrb[0].mxu0 %v986
        %v1022 = vpop.f32.mrb[0].mxu0
        %v1023 = vadd.f32 0.0, %v1022
        %v1024 = vpop.f32.mrb[0].mxu0
        %v1025 = vpop.f32.mrb[0].mxu0
        %v1026 = vadd.f32 0.0, %v1025
        %v1027 = vpop.f32.mrb[0].mxu0
        %1028 = vdwg.mxu0
        %v1029 = vpack.c.bf16 %v1026, %v1023
        %1031 = vrot.lane.b32.xlu0 %v1029, 16
        %v1032 = vpop.permute.xlu0 %1031
        %vm1034 = vcmask 195712
        %1035 = vst.msk [vmem:[#allocation5] sm:$0xff] %vm1034, %v1032
        %v1036 = vld [vmem:[#allocation2] sm:$0xff]
        %v1037 = vld [vmem:[#allocation3] sm:$0xff]
        %v1038 = vld [vmem:[#allocation4] sm:$0xff]
        %s1039 = scalar_lea.vmem [#allocation12], 48
        %v1040 = vld [vmem:[%s1039] sm:$0xff]
        %v1041 = vld [vmem:[%s1039 + $0x8] sm:$0xff]
        %1043 = vrot.lane.b32.xlu0 %v1036, 104
        %v1044 = vpop.permute.xlu0 %1043
        %1046 = vrot.lane.b32.xlu0 %v1037, 104
        %v1047 = vpop.permute.xlu0 %1046
        %v1049 = vsel %vm644, %v1044, 0
        %v1052 = vsel %vm644, %v1047, 0
        %1054 = vmatprep.subr.bf16.mxu0 0
        %1055 = vmatpush1.bf16.xpose.msra.mxu0 %v1052
        %1056 = vmatprep.subr.bf16.mxu0 0
        %1057 = vmatpush1.bf16.xpose.msra.mxu0 0
        %1058 = vmatprep.subr.bf16.mxu0 0
        %1059 = vmatpush1.bf16.xpose.msra.mxu0 0
        %1060 = vmatprep.subr.bf16.mxu0 0
        %1061 = vmatpush1.bf16.xpose.msra.mxu0 0
        %1062 = vmatprep.subr.bf16.mxu0 0
        %1063 = vmatpush1.bf16.xpose.msra.mxu0 0
        %1064 = vmatprep.subr.bf16.mxu0 0
        %1065 = vmatpush1.bf16.xpose.msra.mxu0 0
        %1066 = vmatprep.subr.bf16.mxu0 0
        %1067 = vmatpush1.bf16.xpose.msra.mxu0 0
        %1068 = vmatprep.subr.bf16.mxu0 0
        %1069 = vmatpush1.bf16.xpose.msra.mxu0 0
        %1070 = vmatprep.subr.bf16.mxu0 0
        %1071 = vmatpush1.bf16.xpose.msra.mxu0 0
        %1072 = vmatprep.subr.bf16.mxu0 0
        %1073 = vmatpush1.bf16.xpose.msra.mxu0 0
        %1074 = vmatprep.subr.bf16.mxu0 0
        %1075 = vmatpush1.bf16.xpose.msra.mxu0 0
        %1076 = vmatprep.subr.bf16.mxu0 0
        %1077 = vmatpush1.bf16.xpose.msra.mxu0 0
        %1078 = vmatprep.subr.bf16.mxu0 0
        %1079 = vmatpush1.bf16.xpose.msra.mxu0 0
        %1080 = vmatprep.subr.bf16.mxu0 0
        %1081 = vmatpush1.bf16.xpose.msra.mxu0 0
        %1082 = vmatprep.subr.bf16.mxu0 0
        %1083 = vmatpush1.bf16.xpose.msra.mxu0 0
        %1084 = vmatprep.subr.bf16.mxu0 0
        %1085 = vmatpush1.bf16.xpose.msra.mxu0 0
        %1086 = vmatprep.mubr.bf16.mxu0 0
        %1087 = vmatmul.mubr.bf16.gmra.mrb[0].mxu0 %v1049
        %v1088 = vpop.f32.mrb[0].mxu0
        %v1089 = vadd.f32 %v1040, %v1088
        %v1090 = vpop.f32.mrb[0].mxu0
        %v1091 = vpop.f32.mrb[0].mxu0
        %v1092 = vadd.f32 %v1041, %v1091
        %v1093 = vpop.f32.mrb[0].mxu0
        %1094 = vdwg.mxu0
        %v1095 = vsel %vm692, %v1089, -inf
        %1096 = vmax.xlane.f32.xlu0 %v1095
        %v1097 = vpop.xlane.xlu0 %1096
        %v1098 = vsel %vm692, %v1092, -inf
        %1099 = vmax.xlane.f32.xlu0 %v1098
        %v1100 = vpop.xlane.xlu0 %1099
        %v1101 = vsub.f32 %v1089, %v1097
        %v1102 = vsub.f32 %v1092, %v1100
        %v1103 = vmul.f32 %v1101, 1.442695
        %v1104 = vpow.pop %v1103
        %v1105 = vmul.f32 %v1102, 1.442695
        %v1106 = vpow.pop %v1105
        %v1107 = vsel %vm692, %v1104, 0.0
        %1108 = vadd.xlane.f32.xlu0 %v1107
        %v1109 = vpop.xlane.xlu0 %1108
        %v1110 = vsel %vm692, %v1106, 0.0
        %1111 = vadd.xlane.f32.xlu0 %v1110
        %v1112 = vpop.xlane.xlu0 %1111
        %v1113 = vrcp.pop %v1109
        %v1114 = vmul.f32 %v1104, %v1113
        %v1115 = vrcp.pop %v1112
        %v1116 = vmul.f32 %v1106, %v1115
        %v1117 = vpack.c.bf16 %v1116, %v1114
        %1119 = vrot.lane.b32.xlu0 %v1038, 104
        %v1120 = vpop.permute.xlu0 %1119
        %v1123 = vsel %vm692, %v1117, 0
        %1125 = vmatprep.subr.bf16.mxu0 0
        %1126 = vmatpush1.bf16.msra.mxu0 %v1120
        %1127 = vmatprep.subr.bf16.mxu0 0
        %1128 = vmatpush1.bf16.msra.mxu0 0
        %1129 = vmatprep.subr.bf16.mxu0 0
        %1130 = vmatpush1.bf16.msra.mxu0 0
        %1131 = vmatprep.subr.bf16.mxu0 0
        %1132 = vmatpush1.bf16.msra.mxu0 0
        %1133 = vmatprep.subr.bf16.mxu0 0
        %1134 = vmatpush1.bf16.msra.mxu0 0
        %1135 = vmatprep.subr.bf16.mxu0 0
        %1136 = vmatpush1.bf16.msra.mxu0 0
        %1137 = vmatprep.subr.bf16.mxu0 0
        %1138 = vmatpush1.bf16.msra.mxu0 0
        %1139 = vmatprep.subr.bf16.mxu0 0
        %1140 = vmatpush1.bf16.msra.mxu0 0
        %1141 = vmatprep.subr.bf16.mxu0 0
        %1142 = vmatpush1.bf16.msra.mxu0 0
        %1143 = vmatprep.subr.bf16.mxu0 0
        %1144 = vmatpush1.bf16.msra.mxu0 0
        %1145 = vmatprep.subr.bf16.mxu0 0
        %1146 = vmatpush1.bf16.msra.mxu0 0
        %1147 = vmatprep.subr.bf16.mxu0 0
        %1148 = vmatpush1.bf16.msra.mxu0 0
        %1149 = vmatprep.subr.bf16.mxu0 0
        %1150 = vmatpush1.bf16.msra.mxu0 0
        %1151 = vmatprep.subr.bf16.mxu0 0
        %1152 = vmatpush1.bf16.msra.mxu0 0
        %1153 = vmatprep.subr.bf16.mxu0 0
        %1154 = vmatpush1.bf16.msra.mxu0 0
        %1155 = vmatprep.subr.bf16.mxu0 0
        %1156 = vmatpush1.bf16.msra.mxu0 0
        %1157 = vmatprep.mubr.bf16.mxu0 0
        %1158 = vmatmul.mubr.bf16.gmra.mrb[0].mxu0 %v1123
        %v1159 = vpop.f32.mrb[0].mxu0
        %v1160 = vadd.f32 0.0, %v1159
        %v1161 = vpop.f32.mrb[0].mxu0
        %v1162 = vpop.f32.mrb[0].mxu0
        %v1163 = vadd.f32 0.0, %v1162
        %v1164 = vpop.f32.mrb[0].mxu0
        %1165 = vdwg.mxu0
        %v1166 = vpack.c.bf16 %v1163, %v1160
        %1168 = vrot.lane.b32.xlu0 %v1166, 24
        %v1169 = vpop.permute.xlu0 %1168
        %vm1171 = vcmask 261312
        %1172 = vst.msk [vmem:[#allocation5] sm:$0xff] %vm1171, %v1169
        %v1173 = vld [vmem:[#allocation5] sm:$0xff]
        %v1174 = vld [vmem:[#allocation17] sm:$0xf]
        %v1175 = vld [vmem:[#allocation17 + $0x4] sm:$0xf]
        %v1176 = vld [vmem:[#allocation17 + $0x8] sm:$0xf]
        %v1177 = vld [vmem:[#allocation17 + $0xc] sm:$0xf]
        %v1182 = vunpack.c.l.b16 %v1174
        %v1183 = vunpack.c.l.b16 %v1175
        %v1184 = vunpack.c.l.b16 %v1176
        %v1185 = vunpack.c.l.b16 %v1177
        %v1186 = vpack.c.b16 %v1183, %v1182
        %v1187 = vpack.c.b16 %v1185, %v1184
        %v1191 = vsel %vm468, %v1173, 0
        %1193 = vmatprep.subr.bf16.mxu0 0
        %1194 = vmatpush1.bf16.msra.mxu0 %v1186
        %1195 = vmatprep.subr.bf16.mxu0 0
        %1196 = vmatpush1.bf16.msra.mxu0 %v1187
        %1197 = vmatprep.subr.bf16.mxu0 0
        %1198 = vmatpush1.bf16.msra.mxu0 0
        %1199 = vmatprep.subr.bf16.mxu0 0
        %1200 = vmatpush1.bf16.msra.mxu0 0
        %1201 = vmatprep.subr.bf16.mxu0 0
        %1202 = vmatpush1.bf16.msra.mxu0 0
        %1203 = vmatprep.subr.bf16.mxu0 0
        %1204 = vmatpush1.bf16.msra.mxu0 0
        %1205 = vmatprep.subr.bf16.mxu0 0
        %1206 = vmatpush1.bf16.msra.mxu0 0
        %1207 = vmatprep.subr.bf16.mxu0 0
        %1208 = vmatpush1.bf16.msra.mxu0 0
        %1209 = vmatprep.subr.bf16.mxu0 0
        %1210 = vmatpush1.bf16.msra.mxu0 0
        %1211 = vmatprep.subr.bf16.mxu0 0
        %1212 = vmatpush1.bf16.msra.mxu0 0
        %1213 = vmatprep.subr.bf16.mxu0 0
        %1214 = vmatpush1.bf16.msra.mxu0 0
        %1215 = vmatprep.subr.bf16.mxu0 0
        %1216 = vmatpush1.bf16.msra.mxu0 0
        %1217 = vmatprep.subr.bf16.mxu0 0
        %1218 = vmatpush1.bf16.msra.mxu0 0
        %1219 = vmatprep.subr.bf16.mxu0 0
        %1220 = vmatpush1.bf16.msra.mxu0 0
        %1221 = vmatprep.subr.bf16.mxu0 0
        %1222 = vmatpush1.bf16.msra.mxu0 0
        %1223 = vmatprep.subr.bf16.mxu0 0
        %1224 = vmatpush1.bf16.msra.mxu0 0
        %1225 = vmatprep.mubr.bf16.mxu0 0
        %1226 = vmatmul.mubr.bf16.gmra.mrb[0].mxu0 %v1191
        %v1227 = vpop.f32.mrb[0].mxu0
        %v1228 = vadd.f32 0.0, %v1227
        %v1229 = vpop.f32.mrb[0].mxu0
        %v1230 = vpop.f32.mrb[0].mxu0
        %v1231 = vadd.f32 0.0, %v1230
        %v1232 = vpop.f32.mrb[0].mxu0
        %1233 = vdwg.mxu0
        %v1234 = vld [vmem:[%s8] sm:$0x1]
        %v1236 = vlaneseq
        %v1237 = vshrl.u32 %v1236, 7
        %v1238 = vsub.s32 0, %v1237
        %v1239 = vrot.slane %v1234, %v1238
        %v1241 = vadd.f32 %v1228, %v1239
        %v1242 = vadd.f32 %v1231, %v1239
        %1243 = vst.msk [vmem:[%s437] sm:$0xff] %vm468, %v1241
        %1244 = vst.msk [vmem:[%s437 + $0x8] sm:$0xff] %vm468, %v1242
        %s1245 = sand.u32 %s231, 1
        %s1246 = scalar_lea.sflag [#allocation8], %s1245
        %s1247 = sand.u32 %s231, 1
        %s1248 = smul.addr %s1247, 16
        %s1249 = scalar_lea.vmem [#allocation18], %s1248
        // Predicated region
        $region85: #{tpu_custom_call.1} parent=55 // pred_check
          %p1250 = pneg %p241
        $region86: #{tpu_custom_call.1} parent=55 // pred_check_branch
          %1252 = sbr.rel (%p1250) target = $region88
        $region87: #{tpu_custom_call.1} parent=55 // pred_region
          %s1254 = ssub.s32 256, 256
          %1255 = vsyncadd %s1246, %s1254
          %s1256 = smul.addr %s29, 2
          %s1257 = smul.addr %s1256, 128
          %s1258 = scalar_lea.hbm %s9, %s1257
          %s1259 = sshll.u32 %s1249, 4
          %s1260 = int_to_ptr.vmem [resolvable:$true] %s1259
          %1265 = dma.vmem_to_hbm [thread:$0]  %s1260, 256, %s1258, %s1246, 128, 128, 8
        $region88: #{tpu_custom_call.1} parent=55 // pred_fallthru
          _
      $region56: #{tpu_custom_call.1} parent=5 // pred_fallthru
        _
      %p1266 = scmp.le.s32.totalorder 2, %s24
      // Predicated region
      $region89: #{tpu_custom_call.1} parent=5 // pred_check
        %p1267 = pneg %p1266
      $region90: #{tpu_custom_call.1} parent=5 // pred_check_branch
        %1269 = sbr.rel (%p1267) target = $region92
      $region91: #{tpu_custom_call.1} parent=5 // pred_region
        %s1270 = ssub.s32 %s24, 2
        // Predicated region
        $region93: #{tpu_custom_call.1} parent=91 // pred_check
          %p1271 = pneg %p247
        $region94: #{tpu_custom_call.1} parent=91 // pred_check_branch
          %1273 = sbr.rel (%p1271) target = $region96
        $region95: #{tpu_custom_call.1} parent=91 // pred_region
          %s1274 = sand.u32 %s232, 1
          %s1275 = scalar_lea.sflag [#allocation8], %s1274
          %s1276 = sand.u32 %s232, 1
          %s1277 = smul.addr %s1276, 16
          %s1278 = scalar_lea.vmem [#allocation18], %s1277
          %1279 = dma.done %s1275, 256
        $region96: #{tpu_custom_call.1} parent=91 // pred_fallthru
          _
      $region92: #{tpu_custom_call.1} parent=5 // pred_fallthru
        _
    $region6: #{tpu_custom_call.1} parent=1 // loop_footer
      %s28 = sadd.s32 1, %s24
    $region7: #{tpu_custom_call.1} parent=1 // loop_footer_branch
      %23 = sbr.rel target = $region3
    $region8: #{tpu_custom_call.1} parent=1 // loop_exit
      _
    %1280 = vsyncpa [#allocation7], 1
    %s1281 = scalar_lea.sflag [#allocation7], 1
    %1282 = vsyncpa %s1281, 1
    %1283 = vsyncpa [#allocation10], 1
    %1284 = vsyncpa [#allocation13], 1
    %1285 = vsyncpa [#allocation16], 1
    %1286 = vsyncpa [#allocation8], 1
    %s1287 = scalar_lea.sflag [#allocation8], 1
    %1288 = vsyncpa %s1287, 1

</llo_original>
